<compile_context>
chip_gen: v6e
topology: v6e:2x2x1
jax: 0.10.0
libtpu: 0.0.40
codegen_flags: <defaults>
</compile_context>

<pallas_src>
import jax
import jax.numpy as jnp
from jax.experimental import pallas as pl
from jax.experimental.pallas import tpu as pltpu


# ---------------------------------------------------------------------------
# kernel
# ---------------------------------------------------------------------------
def pmlp_kernel(x_ref,
                w1_ref, b1_ref,
                w2_ref, b2_ref,
                w3_ref, b3_ref,
                w4_ref, b4_ref,
                o_ref):
    # f32 -> bf16 cast inside the kernel (VPU op, hides under MXU/DMA slack).
    x = x_ref[...].astype(w1_ref.dtype)

    # layer 1: Linear -> ReLU -> (dropout = identity in eval)
    h = jnp.dot(x, w1_ref[...], preferred_element_type=jnp.float32) + b1_ref[...]
    h = jnp.maximum(h, 0.0)

    # layer 2
    h = jnp.dot(h.astype(w2_ref.dtype), w2_ref[...],
                preferred_element_type=jnp.float32) + b2_ref[...]
    h = jnp.maximum(h, 0.0)

    # layer 3
    h = jnp.dot(h.astype(w3_ref.dtype), w3_ref[...],
                preferred_element_type=jnp.float32) + b3_ref[...]
    h = jnp.maximum(h, 0.0)

    # layer 4 (logits): f32 accumulate, bf16 lane-dense store.
    out = jnp.dot(h.astype(w4_ref.dtype), w4_ref[...],
                  preferred_element_type=jnp.float32) + b4_ref[...]
    o_ref[...] = out.astype(o_ref.dtype)


# ---------------------------------------------------------------------------
# helpers
# ---------------------------------------------------------------------------
def _round_up(n, m):
    return ((n + m - 1) // m) * m


def _pad2(a, rows, cols):
    r, c = a.shape
    return jnp.pad(a, ((0, rows - r), (0, cols - c)))


def _tpu_generation():
    """Best-effort TPU generation (5 / 6 / 7); 0 if unknown."""
    try:
        kind = jax.devices()[0].device_kind.lower()
    except Exception:
        return 0
    for g in (7, 6, 5):
        if f"v{g}" in kind or f"tpu{g}" in kind or f"tpu {g}" in kind:
            return g
    return 0


def _vmem_budget_bytes(gen):
    if gen >= 7:          # 64 MiB physical per TC -> leave scratch/spill headroom
        return 44 * 1024 * 1024
    if gen in (5, 6):     # 128 MiB physical per TC
        return 100 * 1024 * 1024
    return 64 * 1024 * 1024


def _choose_row_tiling(N, gen, F, Cp, hidden_sum, weight_bytes, budget):
    """Pick (tm, Np): row-tile size and padded row count."""
    # VMEM per row: double-buffered f32 x tile, double-buffered bf16 out tile,
    # f32+bf16 working copies of the hidden activations, bf16 copy of x.
    per_row = 2 * F * 4 + 2 * Cp * 2 + hidden_sum * 6 + F * 2
    avail = int(budget * 0.6) - 2 * weight_bytes
    tm_cap = max(128, min(2048, (max(avail, 0) // max(per_row, 1)) // 128 * 128))

    if gen >= 7:
        # 2 TensorCores: balanced, EVEN number of 128-aligned row tiles.
        n_tiles = max(2, pl.cdiv(N, tm_cap))
        n_tiles += n_tiles % 2
        tm = min(tm_cap, max(128, _round_up(pl.cdiv(N, n_tiles), 128)))
        n_tiles = pl.cdiv(N, tm)
        n_tiles += n_tiles % 2
    else:
        # 1 TensorCore: one big tile when it fits (grid-step overhead ~0.35us).
        align = 256 if gen == 6 else 128
        n_tiles = max(1, pl.cdiv(N, tm_cap))
        tm = min(tm_cap, max(align, _round_up(pl.cdiv(N, n_tiles), align)))
        n_tiles = pl.cdiv(N, tm)
    return tm, n_tiles * tm


# ---------------------------------------------------------------------------
# wrapper
# ---------------------------------------------------------------------------
def pmlp_forward(x, edge_index, params, *, matmul_dtype=jnp.bfloat16):
    """PMLP forward pass. edge_index is ignored (as in the reference)."""
    del edge_index
    (w1, b1), (w2, b2), (w3, b3), (w4, b4) = params
    N, F = x.shape
    H1, H2, H3, C = w1.shape[1], w2.shape[1], w3.shape[1], w4.shape[1]

    # Lane-pad every layer's OUTPUT dim to a multiple of 128 so each matmul
    # result and (most importantly) the output store are lane-dense.  The
    # input feature dim F stays unpadded: x uses a full-extent feature block.
    H1p, H2p, H3p, Cp = (_round_up(d, 128) for d in (H1, H2, H3, C))

    # Zero-padding is semantics-preserving: padded hidden columns get zero
    # weight + zero bias -> ReLU(0) = 0 -> meet zero rows of the next weight.
    w1p = _pad2(w1, F,   H1p).astype(matmul_dtype)
    w2p = _pad2(w2, H1p, H2p).astype(matmul_dtype)
    w3p = _pad2(w3, H2p, H3p).astype(matmul_dtype)
    w4p = _pad2(w4, H3p, Cp ).astype(matmul_dtype)
    b1p = _pad2(b1, 1, H1p).astype(jnp.float32)
    b2p = _pad2(b2, 1, H2p).astype(jnp.float32)
    b3p = _pad2(b3, 1, H3p).astype(jnp.float32)
    b4p = _pad2(b4, 1, Cp ).astype(jnp.float32)
    resident = (w1p, b1p, w2p, b2p, w3p, b3p, w4p, b4p)
    weight_bytes = sum(int(a.size) * a.dtype.itemsize for a in resident)

    gen = _tpu_generation()
    budget = _vmem_budget_bytes(gen)
    tm, Np = _choose_row_tiling(N, gen, F, Cp, H1p + H2p + H3p,
                                weight_bytes, budget)
    grid = (Np // tm,)

    # Rows are only padded when N is not already a multiple of the row tile
    # (no extra HBM pass over x for tile-aligned workloads; dtype unchanged).
    xp = x if Np == N else jnp.pad(x, ((0, Np - N), (0, 0)))

    # Advisory cost estimate so XLA schedules around this custom call.
    flops = 2 * Np * (F * H1p + H1p * H2p + H2p * H3p + H3p * Cp)
    bytes_accessed = (int(xp.size) * xp.dtype.itemsize + weight_bytes
                      + Np * Cp * 2)  # bf16 output slab

    def resident_spec(arr, single_buffer):
        # Constant index map -> fetched once; Buffered(1) drops the second,
        # never-used pipeline buffer and halves the resident VMEM footprint.
        if single_buffer and hasattr(pl, "Buffered"):
            return pl.BlockSpec(arr.shape, lambda i: (0, 0),
                                pipeline_mode=pl.Buffered(buffer_count=1))
        return pl.BlockSpec(arr.shape, lambda i: (0, 0))

    def build(single_buffer_weights):
        return pl.pallas_call(
            pmlp_kernel,
            out_shape=jax.ShapeDtypeStruct((Np, Cp), jnp.bfloat16),
            grid_spec=pltpu.PrefetchScalarGridSpec(
                num_scalar_prefetch=0,
                grid=grid,
                in_specs=[pl.BlockSpec((tm, F), lambda i: (i, 0))]   # x row tile
                         + [resident_spec(a, single_buffer_weights)
                            for a in resident],
                out_specs=pl.BlockSpec((tm, Cp), lambda i: (i, 0)),
            ),
            compiler_params=pltpu.CompilerParams(
                dimension_semantics=("parallel",),
                vmem_limit_bytes=budget,
            ),
            cost_estimate=pl.CostEstimate(
                flops=flops, transcendentals=0, bytes_accessed=bytes_accessed),
        )

    try:
        out_padded = jax.block_until_ready(build(True)(xp, *resident))
    except Exception:
        # Fallback for JAX builds without single-buffer pipeline_mode support:
        # identical semantics, default double-buffering of the weights.
        out_padded = build(False)(xp, *resident)

    # Slice away row / lane padding outside the kernel; return in x's dtype.
    return out_padded[:N, :C].astype(x.dtype)


# ---------------------------------------------------------------------------
# parameter init + pure-JAX reference
# ---------------------------------------------------------------------------
def init_params(key, num_features, h1, h2, h3, num_classes, dtype=jnp.float32):
    """Deterministic synthetic parameter init (Glorot-ish uniform)."""
    dims = [(num_features, h1), (h1, h2), (h2, h3), (h3, num_classes)]
    params = []
    for (din, dout) in dims:
        key, kw, kb = jax.random.split(key, 3)
        scale = (6.0 / (din + dout)) ** 0.5
        w = jax.random.uniform(kw, (din, dout), dtype, -scale, scale)
        b = jax.random.uniform(kb, (1, dout), dtype, -scale, scale)
        params.append((w, b))
    return params


def pmlp_reference(x, params):
    """Plain-JAX f32 reference for correctness checking."""
    (w1, b1), (w2, b2), (w3, b3), (w4, b4) = params
    h = jnp.maximum(x @ w1 + b1, 0.0)
    h = jnp.maximum(h @ w2 + b2, 0.0)
    h = jnp.maximum(h @ w3 + b3, 0.0)
    return h @ w4 + b4


# ---------------------------------------------------------------------------
# demo
# ---------------------------------------------------------------------------
if __name__ == "__main__":
    key = jax.random.PRNGKey(0)

    # Cornell-like shapes (Cornell: N=183 nodes, C=5 classes; F scaled down).
    # Intentionally non-multiples of 8/128 to exercise row + lane padding.
    N, F = 183, 96
    H1, H2, H3, C = 64, 48, 32, 5

    kx, kp, ke = jax.random.split(key, 3)
    x = jax.random.normal(kx, (N, F), jnp.float32)
    # dummy edge_index (unused by PMLP forward, kept for interface parity)
    edge_index = jax.random.randint(ke, (2, 4 * N), 0, N, jnp.int32)

    params = init_params(kp, F, H1, H2, H3, C)

    out = pmlp_forward(x, edge_index, params)
    out = jax.block_until_ready(out)

    ref = pmlp_reference(x, params)
    assert out.shape == (N, C), out.shape
    # bf16 matmul operands / bf16 output slab with f32 accumulation inside.
    assert jnp.allclose(out, ref, atol=5e-2, rtol=5e-2), "mismatch vs reference"

    print("KERNEL_OK")
</pallas_src>

<mosaic_0001>
module attributes {stable_mosaic.version = 11 : i64} {
  func.func @pmlp_kernel(%arg0: i32, %arg1: memref<256x96xf32, #tpu.memory_space<vmem>>, %arg2: memref<96x128xbf16, #tpu.memory_space<vmem>>, %arg3: memref<1x128xf32, #tpu.memory_space<vmem>>, %arg4: memref<128x128xbf16, #tpu.memory_space<vmem>>, %arg5: memref<1x128xf32, #tpu.memory_space<vmem>>, %arg6: memref<128x128xbf16, #tpu.memory_space<vmem>>, %arg7: memref<1x128xf32, #tpu.memory_space<vmem>>, %arg8: memref<128x128xbf16, #tpu.memory_space<vmem>>, %arg9: memref<1x128xf32, #tpu.memory_space<vmem>>, %arg10: memref<256x128xbf16, #tpu.memory_space<vmem>>) attributes {dimension_semantics = [#tpu.dimension_semantics<parallel>], iteration_bounds = array<i64: 1>, scalar_prefetch = 0 : i64, scratch_operands = 0 : i64, tpu.core_type = #tpu.core_type<tc>, window_params = [{transform_indices = @transform_0, window_bounds = array<i64: 256, 96>}, {pipeline_mode = #tpu.pipeline_mode<synchronous>, transform_indices = @transform_1, window_bounds = array<i64: 96, 128>}, {pipeline_mode = #tpu.pipeline_mode<synchronous>, transform_indices = @transform_2, window_bounds = array<i64: 1, 128>}, {pipeline_mode = #tpu.pipeline_mode<synchronous>, transform_indices = @transform_3, window_bounds = array<i64: 128, 128>}, {pipeline_mode = #tpu.pipeline_mode<synchronous>, transform_indices = @transform_4, window_bounds = array<i64: 1, 128>}, {pipeline_mode = #tpu.pipeline_mode<synchronous>, transform_indices = @transform_5, window_bounds = array<i64: 128, 128>}, {pipeline_mode = #tpu.pipeline_mode<synchronous>, transform_indices = @transform_6, window_bounds = array<i64: 1, 128>}, {pipeline_mode = #tpu.pipeline_mode<synchronous>, transform_indices = @transform_7, window_bounds = array<i64: 128, 128>}, {pipeline_mode = #tpu.pipeline_mode<synchronous>, transform_indices = @transform_8, window_bounds = array<i64: 1, 128>}, {transform_indices = @transform_9, window_bounds = array<i64: 256, 128>}]} {
    %c0 = arith.constant 0 : index
    %c0_0 = arith.constant 0 : index
    %0 = vector.load %arg1[%c0, %c0_0] : memref<256x96xf32, #tpu.memory_space<vmem>>, vector<256x96xf32>
    %1 = arith.truncf %0 : vector<256x96xf32> to vector<256x96xbf16>
    %c0_1 = arith.constant 0 : index
    %c0_2 = arith.constant 0 : index
    %2 = vector.load %arg2[%c0_1, %c0_2] : memref<96x128xbf16, #tpu.memory_space<vmem>>, vector<96x128xbf16>
    %cst = arith.constant dense<0.000000e+00> : vector<256x128xf32>
    %3 = tpu.matmul %1, %2, %cst {dimension_numbers = #tpu.dot_dimension_numbers<[1], [0], [0], [1], [0, 0, 1, 1], [], []>} : vector<256x96xbf16>, vector<96x128xbf16>, vector<256x128xf32> -> vector<256x128xf32>
    %c0_3 = arith.constant 0 : index
    %c0_4 = arith.constant 0 : index
    %4 = vector.load %arg3[%c0_3, %c0_4] : memref<1x128xf32, #tpu.memory_space<vmem>>, vector<1x128xf32>
    %5 = vector.broadcast %4 : vector<1x128xf32> to vector<256x128xf32>
    %6 = arith.addf %3, %5 : vector<256x128xf32>
    %cst_5 = arith.constant 0.000000e+00 : f32
    %7 = vector.broadcast %cst_5 : f32 to vector<256x128xf32>
    %8 = arith.maximumf %6, %7 : vector<256x128xf32>
    %9 = arith.truncf %8 : vector<256x128xf32> to vector<256x128xbf16>
    %c0_6 = arith.constant 0 : index
    %c0_7 = arith.constant 0 : index
    %10 = vector.load %arg4[%c0_6, %c0_7] : memref<128x128xbf16, #tpu.memory_space<vmem>>, vector<128x128xbf16>
    %cst_8 = arith.constant dense<0.000000e+00> : vector<256x128xf32>
    %11 = tpu.matmul %9, %10, %cst_8 {dimension_numbers = #tpu.dot_dimension_numbers<[1], [0], [0], [1], [0, 0, 1, 1], [], []>} : vector<256x128xbf16>, vector<128x128xbf16>, vector<256x128xf32> -> vector<256x128xf32>
    %c0_9 = arith.constant 0 : index
    %c0_10 = arith.constant 0 : index
    %12 = vector.load %arg5[%c0_9, %c0_10] : memref<1x128xf32, #tpu.memory_space<vmem>>, vector<1x128xf32>
    %13 = vector.broadcast %12 : vector<1x128xf32> to vector<256x128xf32>
    %14 = arith.addf %11, %13 : vector<256x128xf32>
    %cst_11 = arith.constant 0.000000e+00 : f32
    %15 = vector.broadcast %cst_11 : f32 to vector<256x128xf32>
    %16 = arith.maximumf %14, %15 : vector<256x128xf32>
    %17 = arith.truncf %16 : vector<256x128xf32> to vector<256x128xbf16>
    %c0_12 = arith.constant 0 : index
    %c0_13 = arith.constant 0 : index
    %18 = vector.load %arg6[%c0_12, %c0_13] : memref<128x128xbf16, #tpu.memory_space<vmem>>, vector<128x128xbf16>
    %cst_14 = arith.constant dense<0.000000e+00> : vector<256x128xf32>
    %19 = tpu.matmul %17, %18, %cst_14 {dimension_numbers = #tpu.dot_dimension_numbers<[1], [0], [0], [1], [0, 0, 1, 1], [], []>} : vector<256x128xbf16>, vector<128x128xbf16>, vector<256x128xf32> -> vector<256x128xf32>
    %c0_15 = arith.constant 0 : index
    %c0_16 = arith.constant 0 : index
    %20 = vector.load %arg7[%c0_15, %c0_16] : memref<1x128xf32, #tpu.memory_space<vmem>>, vector<1x128xf32>
    %21 = vector.broadcast %20 : vector<1x128xf32> to vector<256x128xf32>
    %22 = arith.addf %19, %21 : vector<256x128xf32>
    %cst_17 = arith.constant 0.000000e+00 : f32
    %23 = vector.broadcast %cst_17 : f32 to vector<256x128xf32>
    %24 = arith.maximumf %22, %23 : vector<256x128xf32>
    %25 = arith.truncf %24 : vector<256x128xf32> to vector<256x128xbf16>
    %c0_18 = arith.constant 0 : index
    %c0_19 = arith.constant 0 : index
    %26 = vector.load %arg8[%c0_18, %c0_19] : memref<128x128xbf16, #tpu.memory_space<vmem>>, vector<128x128xbf16>
    %cst_20 = arith.constant dense<0.000000e+00> : vector<256x128xf32>
    %27 = tpu.matmul %25, %26, %cst_20 {dimension_numbers = #tpu.dot_dimension_numbers<[1], [0], [0], [1], [0, 0, 1, 1], [], []>} : vector<256x128xbf16>, vector<128x128xbf16>, vector<256x128xf32> -> vector<256x128xf32>
    %c0_21 = arith.constant 0 : index
    %c0_22 = arith.constant 0 : index
    %28 = vector.load %arg9[%c0_21, %c0_22] : memref<1x128xf32, #tpu.memory_space<vmem>>, vector<1x128xf32>
    %29 = vector.broadcast %28 : vector<1x128xf32> to vector<256x128xf32>
    %30 = arith.addf %27, %29 : vector<256x128xf32>
    %31 = arith.truncf %30 : vector<256x128xf32> to vector<256x128xbf16>
    %c0_23 = arith.constant 0 : index
    %c0_24 = arith.constant 0 : index
    %32 = vector.load %arg10[%c0_23, %c0_24] : memref<256x128xbf16, #tpu.memory_space<vmem>>, vector<256x128xbf16>
    tpu.vector_store %arg10[%c0_23, %c0_24], %31 {strides = array<i32>} : memref<256x128xbf16, #tpu.memory_space<vmem>>, vector<256x128xbf16>,
    return
  }
  func.func @transform_0(%arg0: i32) -> (i32, i32) {
    %c0_i32 = arith.constant 0 : i32
    %c0_i32_0 = arith.constant 0 : i32
    return %arg0, %c0_i32 : i32, i32
  }
  func.func @transform_1(%arg0: i32) -> (i32, i32) {
    %c0_i32 = arith.constant 0 : i32
    %c0_i32_0 = arith.constant 0 : i32
    %c0_i32_1 = arith.constant 0 : i32
    return %c0_i32, %c0_i32_0 : i32, i32
  }
  func.func @transform_2(%arg0: i32) -> (i32, i32) {
    %c0_i32 = arith.constant 0 : i32
    %c0_i32_0 = arith.constant 0 : i32
    %c0_i32_1 = arith.constant 0 : i32
    return %c0_i32, %c0_i32_0 : i32, i32
  }
  func.func @transform_3(%arg0: i32) -> (i32, i32) {
    %c0_i32 = arith.constant 0 : i32
    %c0_i32_0 = arith.constant 0 : i32
    %c0_i32_1 = arith.constant 0 : i32
    return %c0_i32, %c0_i32_0 : i32, i32
  }
  func.func @transform_4(%arg0: i32) -> (i32, i32) {
    %c0_i32 = arith.constant 0 : i32
    %c0_i32_0 = arith.constant 0 : i32
    %c0_i32_1 = arith.constant 0 : i32
    return %c0_i32, %c0_i32_0 : i32, i32
  }
  func.func @transform_5(%arg0: i32) -> (i32, i32) {
    %c0_i32 = arith.constant 0 : i32
    %c0_i32_0 = arith.constant 0 : i32
    %c0_i32_1 = arith.constant 0 : i32
    return %c0_i32, %c0_i32_0 : i32, i32
  }
  func.func @transform_6(%arg0: i32) -> (i32, i32) {
    %c0_i32 = arith.constant 0 : i32
    %c0_i32_0 = arith.constant 0 : i32
    %c0_i32_1 = arith.constant 0 : i32
    return %c0_i32, %c0_i32_0 : i32, i32
  }
  func.func @transform_7(%arg0: i32) -> (i32, i32) {
    %c0_i32 = arith.constant 0 : i32
    %c0_i32_0 = arith.constant 0 : i32
    %c0_i32_1 = arith.constant 0 : i32
    return %c0_i32, %c0_i32_0 : i32, i32
  }
  func.func @transform_8(%arg0: i32) -> (i32, i32) {
    %c0_i32 = arith.constant 0 : i32
    %c0_i32_0 = arith.constant 0 : i32
    %c0_i32_1 = arith.constant 0 : i32
    return %c0_i32, %c0_i32_0 : i32, i32
  }
  func.func @transform_9(%arg0: i32) -> (i32, i32) {
    %c0_i32 = arith.constant 0 : i32
    %c0_i32_0 = arith.constant 0 : i32
    return %arg0, %c0_i32 : i32, i32
  }
}

module attributes {stable_mosaic.version = 11 : i64} {
  func.func @pmlp_kernel(%arg0: i32, %arg1: memref<256x96xf32, #tpu.memory_space<vmem>>, %arg2: memref<96x128xbf16, #tpu.memory_space<vmem>>, %arg3: memref<1x128xf32, #tpu.memory_space<vmem>>, %arg4: memref<128x128xbf16, #tpu.memory_space<vmem>>, %arg5: memref<1x128xf32, #tpu.memory_space<vmem>>, %arg6: memref<128x128xbf16, #tpu.memory_space<vmem>>, %arg7: memref<1x128xf32, #tpu.memory_space<vmem>>, %arg8: memref<128x128xbf16, #tpu.memory_space<vmem>>, %arg9: memref<1x128xf32, #tpu.memory_space<vmem>>, %arg10: memref<256x128xbf16, #tpu.memory_space<vmem>>) attributes {dimension_semantics = [#tpu.dimension_semantics<parallel>], iteration_bounds = array<i64: 1>, scalar_prefetch = 0 : i64, scratch_operands = 0 : i64, tpu.core_type = #tpu.core_type<tc>, window_params = [{transform_indices = @transform_0, window_bounds = array<i64: 256, 96>}, {pipeline_mode = #tpu.pipeline_mode<synchronous>, transform_indices = @transform_1, window_bounds = array<i64: 96, 128>}, {pipeline_mode = #tpu.pipeline_mode<synchronous>, transform_indices = @transform_2, window_bounds = array<i64: 1, 128>}, {pipeline_mode = #tpu.pipeline_mode<synchronous>, transform_indices = @transform_3, window_bounds = array<i64: 128, 128>}, {pipeline_mode = #tpu.pipeline_mode<synchronous>, transform_indices = @transform_4, window_bounds = array<i64: 1, 128>}, {pipeline_mode = #tpu.pipeline_mode<synchronous>, transform_indices = @transform_5, window_bounds = array<i64: 128, 128>}, {pipeline_mode = #tpu.pipeline_mode<synchronous>, transform_indices = @transform_6, window_bounds = array<i64: 1, 128>}, {pipeline_mode = #tpu.pipeline_mode<synchronous>, transform_indices = @transform_7, window_bounds = array<i64: 128, 128>}, {pipeline_mode = #tpu.pipeline_mode<synchronous>, transform_indices = @transform_8, window_bounds = array<i64: 1, 128>}, {transform_indices = @transform_9, window_bounds = array<i64: 256, 128>}]} {
    %c0 = arith.constant 0 : index
    %c0_0 = arith.constant 0 : index
    %0 = vector.load %arg1[%c0, %c0_0] : memref<256x96xf32, #tpu.memory_space<vmem>>, vector<256x96xf32>
    %1 = arith.truncf %0 : vector<256x96xf32> to vector<256x96xbf16>
    %c0_1 = arith.constant 0 : index
    %c0_2 = arith.constant 0 : index
    %2 = vector.load %arg2[%c0_1, %c0_2] : memref<96x128xbf16, #tpu.memory_space<vmem>>, vector<96x128xbf16>
    %cst = arith.constant dense<0.000000e+00> : vector<256x128xf32>
    %3 = tpu.matmul %1, %2, %cst {dimension_numbers = #tpu.dot_dimension_numbers<[1], [0], [0], [1], [0, 0, 1, 1], [], []>} : vector<256x96xbf16>, vector<96x128xbf16>, vector<256x128xf32> -> vector<256x128xf32>
    %c0_3 = arith.constant 0 : index
    %c0_4 = arith.constant 0 : index
    %4 = vector.load %arg3[%c0_3, %c0_4] : memref<1x128xf32, #tpu.memory_space<vmem>>, vector<1x128xf32>
    %5 = vector.broadcast %4 : vector<1x128xf32> to vector<256x128xf32>
    %6 = arith.addf %3, %5 : vector<256x128xf32>
    %cst_5 = arith.constant 0.000000e+00 : f32
    %7 = vector.broadcast %cst_5 : f32 to vector<256x128xf32>
    %8 = arith.maximumf %6, %7 : vector<256x128xf32>
    %9 = arith.truncf %8 : vector<256x128xf32> to vector<256x128xbf16>
    %c0_6 = arith.constant 0 : index
    %c0_7 = arith.constant 0 : index
    %10 = vector.load %arg4[%c0_6, %c0_7] : memref<128x128xbf16, #tpu.memory_space<vmem>>, vector<128x128xbf16>
    %cst_8 = arith.constant dense<0.000000e+00> : vector<256x128xf32>
    %11 = tpu.matmul %9, %10, %cst_8 {dimension_numbers = #tpu.dot_dimension_numbers<[1], [0], [0], [1], [0, 0, 1, 1], [], []>} : vector<256x128xbf16>, vector<128x128xbf16>, vector<256x128xf32> -> vector<256x128xf32>
    %c0_9 = arith.constant 0 : index
    %c0_10 = arith.constant 0 : index
    %12 = vector.load %arg5[%c0_9, %c0_10] : memref<1x128xf32, #tpu.memory_space<vmem>>, vector<1x128xf32>
    %13 = vector.broadcast %12 : vector<1x128xf32> to vector<256x128xf32>
    %14 = arith.addf %11, %13 : vector<256x128xf32>
    %cst_11 = arith.constant 0.000000e+00 : f32
    %15 = vector.broadcast %cst_11 : f32 to vector<256x128xf32>
    %16 = arith.maximumf %14, %15 : vector<256x128xf32>
    %17 = arith.truncf %16 : vector<256x128xf32> to vector<256x128xbf16>
    %c0_12 = arith.constant 0 : index
    %c0_13 = arith.constant 0 : index
    %18 = vector.load %arg6[%c0_12, %c0_13] : memref<128x128xbf16, #tpu.memory_space<vmem>>, vector<128x128xbf16>
    %cst_14 = arith.constant dense<0.000000e+00> : vector<256x128xf32>
    %19 = tpu.matmul %17, %18, %cst_14 {dimension_numbers = #tpu.dot_dimension_numbers<[1], [0], [0], [1], [0, 0, 1, 1], [], []>} : vector<256x128xbf16>, vector<128x128xbf16>, vector<256x128xf32> -> vector<256x128xf32>
    %c0_15 = arith.constant 0 : index
    %c0_16 = arith.constant 0 : index
    %20 = vector.load %arg7[%c0_15, %c0_16] : memref<1x128xf32, #tpu.memory_space<vmem>>, vector<1x128xf32>
    %21 = vector.broadcast %20 : vector<1x128xf32> to vector<256x128xf32>
    %22 = arith.addf %19, %21 : vector<256x128xf32>
    %cst_17 = arith.constant 0.000000e+00 : f32
    %23 = vector.broadcast %cst_17 : f32 to vector<256x128xf32>
    %24 = arith.maximumf %22, %23 : vector<256x128xf32>
    %25 = arith.truncf %24 : vector<256x128xf32> to vector<256x128xbf16>
    %c0_18 = arith.constant 0 : index
    %c0_19 = arith.constant 0 : index
    %26 = vector.load %arg8[%c0_18, %c0_19] : memref<128x128xbf16, #tpu.memory_space<vmem>>, vector<128x128xbf16>
    %cst_20 = arith.constant dense<0.000000e+00> : vector<256x128xf32>
    %27 = tpu.matmul %25, %26, %cst_20 {dimension_numbers = #tpu.dot_dimension_numbers<[1], [0], [0], [1], [0, 0, 1, 1], [], []>} : vector<256x128xbf16>, vector<128x128xbf16>, vector<256x128xf32> -> vector<256x128xf32>
    %c0_21 = arith.constant 0 : index
    %c0_22 = arith.constant 0 : index
    %28 = vector.load %arg9[%c0_21, %c0_22] : memref<1x128xf32, #tpu.memory_space<vmem>>, vector<1x128xf32>
    %29 = vector.broadcast %28 : vector<1x128xf32> to vector<256x128xf32>
    %30 = arith.addf %27, %29 : vector<256x128xf32>
    %31 = arith.truncf %30 : vector<256x128xf32> to vector<256x128xbf16>
    %c0_23 = arith.constant 0 : index
    %c0_24 = arith.constant 0 : index
    %32 = vector.load %arg10[%c0_23, %c0_24] : memref<256x128xbf16, #tpu.memory_space<vmem>>, vector<256x128xbf16>
    tpu.vector_store %arg10[%c0_23, %c0_24], %31 {strides = array<i32>} : memref<256x128xbf16, #tpu.memory_space<vmem>>, vector<256x128xbf16>,
    return
  }
  func.func @transform_0(%arg0: i32) -> (i32, i32) {
    %c0_i32 = arith.constant 0 : i32
    %c0_i32_0 = arith.constant 0 : i32
    return %arg0, %c0_i32 : i32, i32
  }
  func.func @transform_1(%arg0: i32) -> (i32, i32) {
    %c0_i32 = arith.constant 0 : i32
    %c0_i32_0 = arith.constant 0 : i32
    %c0_i32_1 = arith.constant 0 : i32
    return %c0_i32, %c0_i32_0 : i32, i32
  }
  func.func @transform_2(%arg0: i32) -> (i32, i32) {
    %c0_i32 = arith.constant 0 : i32
    %c0_i32_0 = arith.constant 0 : i32
    %c0_i32_1 = arith.constant 0 : i32
    return %c0_i32, %c0_i32_0 : i32, i32
  }
  func.func @transform_3(%arg0: i32) -> (i32, i32) {
    %c0_i32 = arith.constant 0 : i32
    %c0_i32_0 = arith.constant 0 : i32
    %c0_i32_1 = arith.constant 0 : i32
    return %c0_i32, %c0_i32_0 : i32, i32
  }
  func.func @transform_4(%arg0: i32) -> (i32, i32) {
    %c0_i32 = arith.constant 0 : i32
    %c0_i32_0 = arith.constant 0 : i32
    %c0_i32_1 = arith.constant 0 : i32
    return %c0_i32, %c0_i32_0 : i32, i32
  }
  func.func @transform_5(%arg0: i32) -> (i32, i32) {
    %c0_i32 = arith.constant 0 : i32
    %c0_i32_0 = arith.constant 0 : i32
    %c0_i32_1 = arith.constant 0 : i32
    return %c0_i32, %c0_i32_0 : i32, i32
  }
  func.func @transform_6(%arg0: i32) -> (i32, i32) {
    %c0_i32 = arith.constant 0 : i32
    %c0_i32_0 = arith.constant 0 : i32
    %c0_i32_1 = arith.constant 0 : i32
    return %c0_i32, %c0_i32_0 : i32, i32
  }
  func.func @transform_7(%arg0: i32) -> (i32, i32) {
    %c0_i32 = arith.constant 0 : i32
    %c0_i32_0 = arith.constant 0 : i32
    %c0_i32_1 = arith.constant 0 : i32
    return %c0_i32, %c0_i32_0 : i32, i32
  }
  func.func @transform_8(%arg0: i32) -> (i32, i32) {
    %c0_i32 = arith.constant 0 : i32
    %c0_i32_0 = arith.constant 0 : i32
    %c0_i32_1 = arith.constant 0 : i32
    return %c0_i32, %c0_i32_0 : i32, i32
  }
  func.func @transform_9(%arg0: i32) -> (i32, i32) {
    %c0_i32 = arith.constant 0 : i32
    %c0_i32_0 = arith.constant 0 : i32
    return %arg0, %c0_i32 : i32, i32
  }
}

</mosaic_0001>

<llo_original>
// kernel: tpu_custom_call.1
$region0: #{tpu_custom_call.1}
  #allocation0 [shape = 'u32[]', space=smem, size = 0x4, offset = 0x4, fixed_abs, tag = 'smem constant byte address 0x4 - core index']
  #allocation1 [shape = 'u32[144,128]{1,0:T(1,128)}', space=vmem, size = 0x12000, scoped, tag = 'internal scratch']
  %s0 = inlined_call_operand.vmem [shape: f32[256,96], index: 0, kind: input, shape index: {}]
  %s1 = inlined_call_operand.vmem [shape: bf16[96,128], index: 1, kind: input, shape index: {}]
  %s2 = inlined_call_operand.vmem [shape: f32[1,128], index: 2, kind: input, shape index: {}]
  %s3 = inlined_call_operand.vmem [shape: bf16[128,128], index: 3, kind: input, shape index: {}]
  %s4 = inlined_call_operand.vmem [shape: f32[1,128], index: 4, kind: input, shape index: {}]
  %s5 = inlined_call_operand.vmem [shape: bf16[128,128], index: 5, kind: input, shape index: {}]
  %s6 = inlined_call_operand.vmem [shape: f32[1,128], index: 6, kind: input, shape index: {}]
  %s7 = inlined_call_operand.vmem [shape: bf16[128,128], index: 7, kind: input, shape index: {}]
  %s8 = inlined_call_operand.vmem [shape: f32[1,128], index: 8, kind: input, shape index: {}]
  %s9 = inlined_call_operand.hbm [shape: bf16[256,128], index: 9, kind: output, shape index: {}]
  %s10 = sld [smem:[#allocation0]]
  $region46: #{tpu_custom_call.1} parent=0
    _
  %s12 = ssub.s32 1, %s10
  %s13 = scalar_select 0, %s12, %s10
  $region1: #{tpu_custom_call.1} parent=0
    #allocation2 [shape = 'u8[65536]{0}', space=vmem, size = 0x10000, scoped, tag = 'output window, operand 0, single buffered']
    #allocation3 [shape = 's32[1]{0}', space=sflag, size = 0x4, scoped, tag = 'scoped memory for tpu_custom_call.1']
    %14 = vsyncpa [#allocation3], 0
    // Predicated region
    $region2: #{tpu_custom_call.1} parent=1 // pred_check
      _
    $region3: #{tpu_custom_call.1} parent=1 // pred_check_branch
      %16 = sbr.rel (0) target = $region5
    $region4: #{tpu_custom_call.1} parent=1 // pred_region
      _
    $region5: #{tpu_custom_call.1} parent=1 // pred_fallthru
      _
    // Predicated region
    $region6: #{tpu_custom_call.1} parent=1 // pred_check
      _
    $region7: #{tpu_custom_call.1} parent=1 // pred_check_branch
      %18 = sbr.rel (0) target = $region9
    $region8: #{tpu_custom_call.1} parent=1 // pred_region
      _
    $region9: #{tpu_custom_call.1} parent=1 // pred_fallthru
      _
    // Predicated region
    $region10: #{tpu_custom_call.1} parent=1 // pred_check
      _
    $region11: #{tpu_custom_call.1} parent=1 // pred_check_branch
      %20 = sbr.rel (0) target = $region13
    $region12: #{tpu_custom_call.1} parent=1 // pred_region
      _
    $region13: #{tpu_custom_call.1} parent=1 // pred_fallthru
      _
    // Predicated region
    $region14: #{tpu_custom_call.1} parent=1 // pred_check
      _
    $region15: #{tpu_custom_call.1} parent=1 // pred_check_branch
      %22 = sbr.rel (0) target = $region17
    $region16: #{tpu_custom_call.1} parent=1 // pred_region
      _
    $region17: #{tpu_custom_call.1} parent=1 // pred_fallthru
      _
    // Predicated region
    $region18: #{tpu_custom_call.1} parent=1 // pred_check
      _
    $region19: #{tpu_custom_call.1} parent=1 // pred_check_branch
      %24 = sbr.rel (0) target = $region21
    $region20: #{tpu_custom_call.1} parent=1 // pred_region
      _
    $region21: #{tpu_custom_call.1} parent=1 // pred_fallthru
      _
    // Predicated region
    $region22: #{tpu_custom_call.1} parent=1 // pred_check
      _
    $region23: #{tpu_custom_call.1} parent=1 // pred_check_branch
      %26 = sbr.rel (0) target = $region25
    $region24: #{tpu_custom_call.1} parent=1 // pred_region
      _
    $region25: #{tpu_custom_call.1} parent=1 // pred_fallthru
      _
    // Predicated region
    $region26: #{tpu_custom_call.1} parent=1 // pred_check
      _
    $region27: #{tpu_custom_call.1} parent=1 // pred_check_branch
      %28 = sbr.rel (0) target = $region29
    $region28: #{tpu_custom_call.1} parent=1 // pred_region
      _
    $region29: #{tpu_custom_call.1} parent=1 // pred_fallthru
      _
    // Predicated region
    $region30: #{tpu_custom_call.1} parent=1 // pred_check
      _
    $region31: #{tpu_custom_call.1} parent=1 // pred_check_branch
      %30 = sbr.rel (0) target = $region33
    $region32: #{tpu_custom_call.1} parent=1 // pred_region
      _
    $region33: #{tpu_custom_call.1} parent=1 // pred_fallthru
      _
    // Predicated region
    $region34: #{tpu_custom_call.1} parent=1 // pred_check
      _
    $region35: #{tpu_custom_call.1} parent=1 // pred_check_branch
      %32 = sbr.rel (0) target = $region37
    $region36: #{tpu_custom_call.1} parent=1 // pred_region
      _
    $region37: #{tpu_custom_call.1} parent=1 // pred_fallthru
      _
    %v34 = vld [vmem:[%s0] sm:$0xff]
    %v35 = vld [vmem:[%s0 + $0x8] sm:$0xff]
    %v36 = vld [vmem:[%s0 + $0x10] sm:$0xff]
    %v37 = vld [vmem:[%s0 + $0x18] sm:$0xff]
    %v38 = vld [vmem:[%s0 + $0x20] sm:$0xff]
    %v39 = vld [vmem:[%s0 + $0x28] sm:$0xff]
    %v40 = vld [vmem:[%s0 + $0x30] sm:$0xff]
    %v41 = vld [vmem:[%s0 + $0x38] sm:$0xff]
    %v42 = vld [vmem:[%s0 + $0x40] sm:$0xff]
    %v43 = vld [vmem:[%s0 + $0x48] sm:$0xff]
    %v44 = vld [vmem:[%s0 + $0x50] sm:$0xff]
    %v45 = vld [vmem:[%s0 + $0x58] sm:$0xff]
    %v46 = vld [vmem:[%s0 + $0x60] sm:$0xff]
    %v47 = vld [vmem:[%s0 + $0x68] sm:$0xff]
    %v48 = vld [vmem:[%s0 + $0x70] sm:$0xff]
    %v49 = vld [vmem:[%s0 + $0x78] sm:$0xff]
    %v50 = vld [vmem:[%s0 + $0x80] sm:$0xff]
    %v51 = vld [vmem:[%s0 + $0x88] sm:$0xff]
    %v52 = vld [vmem:[%s0 + $0x90] sm:$0xff]
    %v53 = vld [vmem:[%s0 + $0x98] sm:$0xff]
    %v54 = vld [vmem:[%s0 + $0xa0] sm:$0xff]
    %v55 = vld [vmem:[%s0 + $0xa8] sm:$0xff]
    %v56 = vld [vmem:[%s0 + $0xb0] sm:$0xff]
    %v57 = vld [vmem:[%s0 + $0xb8] sm:$0xff]
    %v58 = vld [vmem:[%s0 + $0xc0] sm:$0xff]
    %v59 = vld [vmem:[%s0 + $0xc8] sm:$0xff]
    %v60 = vld [vmem:[%s0 + $0xd0] sm:$0xff]
    %v61 = vld [vmem:[%s0 + $0xd8] sm:$0xff]
    %v62 = vld [vmem:[%s0 + $0xe0] sm:$0xff]
    %v63 = vld [vmem:[%s0 + $0xe8] sm:$0xff]
    %v64 = vld [vmem:[%s0 + $0xf0] sm:$0xff]
    %v65 = vld [vmem:[%s0 + $0xf8] sm:$0xff]
    %v66 = vpack.c.bf16 %v35, %v34
    %v67 = vpack.c.bf16 %v37, %v36
    %v68 = vpack.c.bf16 %v39, %v38
    %v69 = vpack.c.bf16 %v41, %v40
    %v70 = vpack.c.bf16 %v43, %v42
    %v71 = vpack.c.bf16 %v45, %v44
    %v72 = vpack.c.bf16 %v47, %v46
    %v73 = vpack.c.bf16 %v49, %v48
    %v74 = vpack.c.bf16 %v51, %v50
    %v75 = vpack.c.bf16 %v53, %v52
    %v76 = vpack.c.bf16 %v55, %v54
    %v77 = vpack.c.bf16 %v57, %v56
    %v78 = vpack.c.bf16 %v59, %v58
    %v79 = vpack.c.bf16 %v61, %v60
    %v80 = vpack.c.bf16 %v63, %v62
    %v81 = vpack.c.bf16 %v65, %v64
    %v82 = vld [vmem:[%s1] sm:$0xf]
    %v83 = vld [vmem:[%s1 + $0x4] sm:$0xf]
    %v84 = vld [vmem:[%s1 + $0x8] sm:$0xf]
    %v85 = vld [vmem:[%s1 + $0xc] sm:$0xf]
    %v86 = vld [vmem:[%s1 + $0x10] sm:$0xf]
    %v87 = vld [vmem:[%s1 + $0x14] sm:$0xf]
    %v88 = vld [vmem:[%s1 + $0x18] sm:$0xf]
    %v89 = vld [vmem:[%s1 + $0x1c] sm:$0xf]
    %v90 = vld [vmem:[%s1 + $0x20] sm:$0xf]
    %v91 = vld [vmem:[%s1 + $0x24] sm:$0xf]
    %v92 = vld [vmem:[%s1 + $0x28] sm:$0xf]
    %v93 = vld [vmem:[%s1 + $0x2c] sm:$0xf]
    %v94 = vld [vmem:[%s2] sm:$0x1]
    %v96 = vlaneseq
    %v97 = vshrl.u32 %v96, 7
    %v98 = vsub.s32 0, %v97
    %v99 = vrot.slane %v94, %v98
    %v113 = vunpack.c.l.b16 %v82
    %v114 = vunpack.c.l.b16 %v83
    %v115 = vunpack.c.l.b16 %v84
    %v116 = vunpack.c.l.b16 %v85
    %v117 = vunpack.c.l.b16 %v86
    %v118 = vunpack.c.l.b16 %v87
    %v119 = vunpack.c.l.b16 %v88
    %v120 = vunpack.c.l.b16 %v89
    %v121 = vunpack.c.l.b16 %v90
    %v122 = vunpack.c.l.b16 %v91
    %v123 = vunpack.c.l.b16 %v92
    %v124 = vunpack.c.l.b16 %v93
    %v125 = vpack.c.b16 %v114, %v113
    %v126 = vpack.c.b16 %v116, %v115
    %v127 = vpack.c.b16 %v118, %v117
    %v128 = vpack.c.b16 %v120, %v119
    %v129 = vpack.c.b16 %v122, %v121
    %v130 = vpack.c.b16 %v124, %v123
    %vm137 = vcmask 785408
    %v139 = vsel %vm137, %v66, 0
    %v142 = vsel %vm137, %v67, 0
    %v145 = vsel %vm137, %v68, 0
    %v148 = vsel %vm137, %v69, 0
    %v151 = vsel %vm137, %v70, 0
    %v154 = vsel %vm137, %v71, 0
    %v157 = vsel %vm137, %v72, 0
    %v160 = vsel %vm137, %v73, 0
    %v163 = vsel %vm137, %v74, 0
    %v166 = vsel %vm137, %v75, 0
    %v169 = vsel %vm137, %v76, 0
    %v172 = vsel %vm137, %v77, 0
    %v175 = vsel %vm137, %v78, 0
    %v178 = vsel %vm137, %v79, 0
    %v181 = vsel %vm137, %v80, 0
    %v184 = vsel %vm137, %v81, 0
    %186 = vmatprep.subr.bf16.mxu0 0
    %187 = vmatpush1.bf16.msra.mxu0 0
    %188 = vmatprep.subr.bf16.mxu0 0
    %189 = vmatpush1.bf16.msra.mxu0 0
    %190 = vmatprep.subr.bf16.mxu0 0
    %191 = vmatpush1.bf16.msra.mxu0 %v130
    %192 = vmatprep.subr.bf16.mxu0 0
    %193 = vmatpush1.bf16.msra.mxu0 %v129
    %194 = vmatprep.subr.bf16.mxu0 0
    %195 = vmatpush1.bf16.msra.mxu0 %v128
    %196 = vmatprep.subr.bf16.mxu0 0
    %197 = vmatpush1.bf16.msra.mxu0 %v127
    %198 = vmatprep.subr.bf16.mxu0 0
    %199 = vmatpush1.bf16.msra.mxu0 %v126
    %200 = vmatprep.subr.bf16.mxu0 0
    %201 = vmatpush1.bf16.msra.mxu0 %v125
    %202 = vmatprep.subr.bf16.mxu0 0
    %203 = vmatpush2.bf16.msra.mxu0 0
    %204 = vmatprep.subr.bf16.mxu0 0
    %205 = vmatpush2.bf16.msra.mxu0 0
    %206 = vmatprep.subr.bf16.mxu0 0
    %207 = vmatpush2.bf16.msra.mxu0 0
    %208 = vmatprep.subr.bf16.mxu0 0
    %209 = vmatpush2.bf16.msra.mxu0 0
    %210 = vmatprep.subr.bf16.mxu0 0
    %211 = vmatpush2.bf16.msra.mxu0 0
    %212 = vmatprep.subr.bf16.mxu0 0
    %213 = vmatpush2.bf16.msra.mxu0 0
    %214 = vmatprep.subr.bf16.mxu0 0
    %215 = vmatpush2.bf16.msra.mxu0 0
    %216 = vmatprep.subr.bf16.mxu0 0
    %217 = vmatpush2.bf16.msra.mxu0 0
    %218 = vmatprep.mubr.bf16.mxu0 0
    %219 = vmatmul.mubr.bf16.gmra.mxu0 %v139
    %v220 = vpop.f32.mrf.mxu0
    %v221 = vadd.f32 %v99, %v220
    %v222 = vpop.f32.mrf.mxu0
    %v223 = vpop.f32.mrf.mxu0
    %v224 = vadd.f32 %v99, %v223
    %v225 = vpop.f32.mrf.mxu0
    %226 = vmatprep.mubr.bf16.mxu0 0
    %227 = vmatmul.mubr.bf16.gmra.mxu0 %v142
    %v228 = vpop.f32.mrf.mxu0
    %v229 = vadd.f32 %v99, %v228
    %v230 = vpop.f32.mrf.mxu0
    %v231 = vpop.f32.mrf.mxu0
    %v232 = vadd.f32 %v99, %v231
    %v233 = vpop.f32.mrf.mxu0
    %234 = vmatprep.mubr.bf16.mxu0 0
    %235 = vmatmul.mubr.bf16.gmra.mxu0 %v145
    %v236 = vpop.f32.mrf.mxu0
    %v237 = vadd.f32 %v99, %v236
    %v238 = vpop.f32.mrf.mxu0
    %v239 = vpop.f32.mrf.mxu0
    %v240 = vadd.f32 %v99, %v239
    %v241 = vpop.f32.mrf.mxu0
    %242 = vmatprep.mubr.bf16.mxu0 0
    %243 = vmatmul.mubr.bf16.gmra.mxu0 %v148
    %v244 = vpop.f32.mrf.mxu0
    %v245 = vadd.f32 %v99, %v244
    %v246 = vpop.f32.mrf.mxu0
    %v247 = vpop.f32.mrf.mxu0
    %v248 = vadd.f32 %v99, %v247
    %v249 = vpop.f32.mrf.mxu0
    %250 = vmatprep.mubr.bf16.mxu0 0
    %251 = vmatmul.mubr.bf16.gmra.mxu0 %v151
    %v252 = vpop.f32.mrf.mxu0
    %v253 = vadd.f32 %v99, %v252
    %v254 = vpop.f32.mrf.mxu0
    %v255 = vpop.f32.mrf.mxu0
    %v256 = vadd.f32 %v99, %v255
    %v257 = vpop.f32.mrf.mxu0
    %258 = vmatprep.mubr.bf16.mxu0 0
    %259 = vmatmul.mubr.bf16.gmra.mxu0 %v154
    %v260 = vpop.f32.mrf.mxu0
    %v261 = vadd.f32 %v99, %v260
    %v262 = vpop.f32.mrf.mxu0
    %v263 = vpop.f32.mrf.mxu0
    %v264 = vadd.f32 %v99, %v263
    %v265 = vpop.f32.mrf.mxu0
    %266 = vmatprep.mubr.bf16.mxu0 0
    %267 = vmatmul.mubr.bf16.gmra.mxu0 %v157
    %v268 = vpop.f32.mrf.mxu0
    %v269 = vadd.f32 %v99, %v268
    %v270 = vpop.f32.mrf.mxu0
    %v271 = vpop.f32.mrf.mxu0
    %v272 = vadd.f32 %v99, %v271
    %v273 = vpop.f32.mrf.mxu0
    %274 = vmatprep.mubr.bf16.mxu0 0
    %275 = vmatmul.mubr.bf16.gmra.mxu0 %v160
    %v276 = vpop.f32.mrf.mxu0
    %v277 = vadd.f32 %v99, %v276
    %v278 = vpop.f32.mrf.mxu0
    %v279 = vpop.f32.mrf.mxu0
    %v280 = vadd.f32 %v99, %v279
    %v281 = vpop.f32.mrf.mxu0
    %282 = vmatprep.mubr.bf16.mxu0 0
    %283 = vmatmul.mubr.bf16.gmra.mxu0 %v163
    %v284 = vpop.f32.mrf.mxu0
    %v285 = vadd.f32 %v99, %v284
    %v286 = vpop.f32.mrf.mxu0
    %v287 = vpop.f32.mrf.mxu0
    %v288 = vadd.f32 %v99, %v287
    %v289 = vpop.f32.mrf.mxu0
    %290 = vmatprep.mubr.bf16.mxu0 0
    %291 = vmatmul.mubr.bf16.gmra.mxu0 %v166
    %v292 = vpop.f32.mrf.mxu0
    %v293 = vadd.f32 %v99, %v292
    %v294 = vpop.f32.mrf.mxu0
    %v295 = vpop.f32.mrf.mxu0
    %v296 = vadd.f32 %v99, %v295
    %v297 = vpop.f32.mrf.mxu0
    %298 = vmatprep.mubr.bf16.mxu0 0
    %299 = vmatmul.mubr.bf16.gmra.mxu0 %v169
    %v300 = vpop.f32.mrf.mxu0
    %v301 = vadd.f32 %v99, %v300
    %v302 = vpop.f32.mrf.mxu0
    %v303 = vpop.f32.mrf.mxu0
    %v304 = vadd.f32 %v99, %v303
    %v305 = vpop.f32.mrf.mxu0
    %306 = vmatprep.mubr.bf16.mxu0 0
    %307 = vmatmul.mubr.bf16.gmra.mxu0 %v172
    %v308 = vpop.f32.mrf.mxu0
    %v309 = vadd.f32 %v99, %v308
    %v310 = vpop.f32.mrf.mxu0
    %v311 = vpop.f32.mrf.mxu0
    %v312 = vadd.f32 %v99, %v311
    %v313 = vpop.f32.mrf.mxu0
    %314 = vmatprep.mubr.bf16.mxu0 0
    %315 = vmatmul.mubr.bf16.gmra.mxu0 %v175
    %v316 = vpop.f32.mrf.mxu0
    %v317 = vadd.f32 %v99, %v316
    %v318 = vpop.f32.mrf.mxu0
    %v319 = vpop.f32.mrf.mxu0
    %v320 = vadd.f32 %v99, %v319
    %v321 = vpop.f32.mrf.mxu0
    %322 = vmatprep.mubr.bf16.mxu0 0
    %323 = vmatmul.mubr.bf16.gmra.mxu0 %v178
    %v324 = vpop.f32.mrf.mxu0
    %v325 = vadd.f32 %v99, %v324
    %v326 = vpop.f32.mrf.mxu0
    %v327 = vpop.f32.mrf.mxu0
    %v328 = vadd.f32 %v99, %v327
    %v329 = vpop.f32.mrf.mxu0
    %330 = vmatprep.mubr.bf16.mxu0 0
    %331 = vmatmul.mubr.bf16.gmra.mxu0 %v181
    %v332 = vpop.f32.mrf.mxu0
    %v333 = vadd.f32 %v99, %v332
    %v334 = vpop.f32.mrf.mxu0
    %v335 = vpop.f32.mrf.mxu0
    %v336 = vadd.f32 %v99, %v335
    %v337 = vpop.f32.mrf.mxu0
    %338 = vmatprep.mubr.bf16.mxu0 0
    %339 = vmatmul.mubr.bf16.gmra.mxu0 %v184
    %v340 = vpop.f32.mrf.mxu0
    %v341 = vadd.f32 %v99, %v340
    %v342 = vpop.f32.mrf.mxu0
    %v343 = vpop.f32.mrf.mxu0
    %v344 = vadd.f32 %v99, %v343
    %v345 = vpop.f32.mrf.mxu0
    %346 = vdwg.mxu0
    %v347 = vmax.f32 %v221, 0.0
    %v348 = vmax.f32 %v224, 0.0
    %v349 = vmax.f32 %v229, 0.0
    %v350 = vmax.f32 %v232, 0.0
    %v351 = vmax.f32 %v237, 0.0
    %v352 = vmax.f32 %v240, 0.0
    %v353 = vmax.f32 %v245, 0.0
    %v354 = vmax.f32 %v248, 0.0
    %v355 = vmax.f32 %v253, 0.0
    %v356 = vmax.f32 %v256, 0.0
    %v357 = vmax.f32 %v261, 0.0
    %v358 = vmax.f32 %v264, 0.0
    %v359 = vmax.f32 %v269, 0.0
    %v360 = vmax.f32 %v272, 0.0
    %v361 = vmax.f32 %v277, 0.0
    %v362 = vmax.f32 %v280, 0.0
    %v363 = vmax.f32 %v285, 0.0
    %v364 = vmax.f32 %v288, 0.0
    %v365 = vmax.f32 %v293, 0.0
    %v366 = vmax.f32 %v296, 0.0
    %v367 = vmax.f32 %v301, 0.0
    %v368 = vmax.f32 %v304, 0.0
    %v369 = vmax.f32 %v309, 0.0
    %v370 = vmax.f32 %v312, 0.0
    %v371 = vmax.f32 %v317, 0.0
    %v372 = vmax.f32 %v320, 0.0
    %v373 = vmax.f32 %v325, 0.0
    %v374 = vmax.f32 %v328, 0.0
    %v375 = vmax.f32 %v333, 0.0
    %v376 = vmax.f32 %v336, 0.0
    %v377 = vmax.f32 %v341, 0.0
    %v378 = vmax.f32 %v344, 0.0
    %v379 = vpack.c.bf16 %v348, %v347
    %v380 = vpack.c.bf16 %v350, %v349
    %v381 = vpack.c.bf16 %v352, %v351
    %v382 = vpack.c.bf16 %v354, %v353
    %v383 = vpack.c.bf16 %v356, %v355
    %v384 = vpack.c.bf16 %v358, %v357
    %v385 = vpack.c.bf16 %v360, %v359
    %v386 = vpack.c.bf16 %v362, %v361
    %v387 = vpack.c.bf16 %v364, %v363
    %v388 = vpack.c.bf16 %v366, %v365
    %v389 = vpack.c.bf16 %v368, %v367
    %v390 = vpack.c.bf16 %v370, %v369
    %v391 = vpack.c.bf16 %v372, %v371
    %v392 = vpack.c.bf16 %v374, %v373
    %v393 = vpack.c.bf16 %v376, %v375
    %v394 = vpack.c.bf16 %v378, %v377
    %v395 = vld [vmem:[%s3] sm:$0xf]
    %v396 = vld [vmem:[%s3 + $0x4] sm:$0xf]
    %v397 = vld [vmem:[%s3 + $0x8] sm:$0xf]
    %v398 = vld [vmem:[%s3 + $0xc] sm:$0xf]
    %v399 = vld [vmem:[%s3 + $0x10] sm:$0xf]
    %v400 = vld [vmem:[%s3 + $0x14] sm:$0xf]
    %v401 = vld [vmem:[%s3 + $0x18] sm:$0xf]
    %v402 = vld [vmem:[%s3 + $0x1c] sm:$0xf]
    %v403 = vld [vmem:[%s3 + $0x20] sm:$0xf]
    %v404 = vld [vmem:[%s3 + $0x24] sm:$0xf]
    %v405 = vld [vmem:[%s3 + $0x28] sm:$0xf]
    %v406 = vld [vmem:[%s3 + $0x2c] sm:$0xf]
    %v407 = vld [vmem:[%s3 + $0x30] sm:$0xf]
    %v408 = vld [vmem:[%s3 + $0x34] sm:$0xf]
    %v409 = vld [vmem:[%s3 + $0x38] sm:$0xf]
    %v410 = vld [vmem:[%s3 + $0x3c] sm:$0xf]
    %v411 = vld [vmem:[%s4] sm:$0x1]
    %v413 = vlaneseq
    %v414 = vshrl.u32 %v413, 7
    %v415 = vsub.s32 0, %v414
    %v416 = vrot.slane %v411, %v415
    %v434 = vunpack.c.l.b16 %v395
    %v435 = vunpack.c.l.b16 %v396
    %v436 = vunpack.c.l.b16 %v397
    %v437 = vunpack.c.l.b16 %v398
    %v438 = vunpack.c.l.b16 %v399
    %v439 = vunpack.c.l.b16 %v400
    %v440 = vunpack.c.l.b16 %v401
    %v441 = vunpack.c.l.b16 %v402
    %v442 = vunpack.c.l.b16 %v403
    %v443 = vunpack.c.l.b16 %v404
    %v444 = vunpack.c.l.b16 %v405
    %v445 = vunpack.c.l.b16 %v406
    %v446 = vunpack.c.l.b16 %v407
    %v447 = vunpack.c.l.b16 %v408
    %v448 = vunpack.c.l.b16 %v409
    %v449 = vunpack.c.l.b16 %v410
    %v450 = vpack.c.b16 %v435, %v434
    %v451 = vpack.c.b16 %v437, %v436
    %v452 = vpack.c.b16 %v439, %v438
    %v453 = vpack.c.b16 %v441, %v440
    %v454 = vpack.c.b16 %v443, %v442
    %v455 = vpack.c.b16 %v445, %v444
    %v456 = vpack.c.b16 %v447, %v446
    %v457 = vpack.c.b16 %v449, %v448
    %466 = vmatprep.subr.bf16.mxu0 0
    %467 = vmatpush1.bf16.msra.mxu0 %v457
    %468 = vmatprep.subr.bf16.mxu0 0
    %469 = vmatpush1.bf16.msra.mxu0 %v456
    %470 = vmatprep.subr.bf16.mxu0 0
    %471 = vmatpush1.bf16.msra.mxu0 %v455
    %472 = vmatprep.subr.bf16.mxu0 0
    %473 = vmatpush1.bf16.msra.mxu0 %v454
    %474 = vmatprep.subr.bf16.mxu0 0
    %475 = vmatpush1.bf16.msra.mxu0 %v453
    %476 = vmatprep.subr.bf16.mxu0 0
    %477 = vmatpush1.bf16.msra.mxu0 %v452
    %478 = vmatprep.subr.bf16.mxu0 0
    %479 = vmatpush1.bf16.msra.mxu0 %v451
    %480 = vmatprep.subr.bf16.mxu0 0
    %481 = vmatpush1.bf16.msra.mxu0 %v450
    %482 = vmatprep.subr.bf16.mxu0 0
    %483 = vmatpush2.bf16.msra.mxu0 0
    %484 = vmatprep.subr.bf16.mxu0 0
    %485 = vmatpush2.bf16.msra.mxu0 0
    %486 = vmatprep.subr.bf16.mxu0 0
    %487 = vmatpush2.bf16.msra.mxu0 0
    %488 = vmatprep.subr.bf16.mxu0 0
    %489 = vmatpush2.bf16.msra.mxu0 0
    %490 = vmatprep.subr.bf16.mxu0 0
    %491 = vmatpush2.bf16.msra.mxu0 0
    %492 = vmatprep.subr.bf16.mxu0 0
    %493 = vmatpush2.bf16.msra.mxu0 0
    %494 = vmatprep.subr.bf16.mxu0 0
    %495 = vmatpush2.bf16.msra.mxu0 0
    %496 = vmatprep.subr.bf16.mxu0 0
    %497 = vmatpush2.bf16.msra.mxu0 0
    %498 = vmatprep.mubr.bf16.mxu0 0
    %499 = vmatmul.mubr.bf16.gmra.mxu0 %v379
    %v500 = vpop.f32.mrf.mxu0
    %v501 = vadd.f32 %v416, %v500
    %v502 = vpop.f32.mrf.mxu0
    %v503 = vpop.f32.mrf.mxu0
    %v504 = vadd.f32 %v416, %v503
    %v505 = vpop.f32.mrf.mxu0
    %506 = vmatprep.mubr.bf16.mxu0 0
    %507 = vmatmul.mubr.bf16.gmra.mxu0 %v380
    %v508 = vpop.f32.mrf.mxu0
    %v509 = vadd.f32 %v416, %v508
    %v510 = vpop.f32.mrf.mxu0
    %v511 = vpop.f32.mrf.mxu0
    %v512 = vadd.f32 %v416, %v511
    %v513 = vpop.f32.mrf.mxu0
    %514 = vmatprep.mubr.bf16.mxu0 0
    %515 = vmatmul.mubr.bf16.gmra.mxu0 %v381
    %v516 = vpop.f32.mrf.mxu0
    %v517 = vadd.f32 %v416, %v516
    %v518 = vpop.f32.mrf.mxu0
    %v519 = vpop.f32.mrf.mxu0
    %v520 = vadd.f32 %v416, %v519
    %v521 = vpop.f32.mrf.mxu0
    %522 = vmatprep.mubr.bf16.mxu0 0
    %523 = vmatmul.mubr.bf16.gmra.mxu0 %v382
    %v524 = vpop.f32.mrf.mxu0
    %v525 = vadd.f32 %v416, %v524
    %v526 = vpop.f32.mrf.mxu0
    %v527 = vpop.f32.mrf.mxu0
    %v528 = vadd.f32 %v416, %v527
    %v529 = vpop.f32.mrf.mxu0
    %530 = vmatprep.mubr.bf16.mxu0 0
    %531 = vmatmul.mubr.bf16.gmra.mxu0 %v383
    %v532 = vpop.f32.mrf.mxu0
    %v533 = vadd.f32 %v416, %v532
    %v534 = vpop.f32.mrf.mxu0
    %v535 = vpop.f32.mrf.mxu0
    %v536 = vadd.f32 %v416, %v535
    %v537 = vpop.f32.mrf.mxu0
    %538 = vmatprep.mubr.bf16.mxu0 0
    %539 = vmatmul.mubr.bf16.gmra.mxu0 %v384
    %v540 = vpop.f32.mrf.mxu0
    %v541 = vadd.f32 %v416, %v540
    %v542 = vpop.f32.mrf.mxu0
    %v543 = vpop.f32.mrf.mxu0
    %v544 = vadd.f32 %v416, %v543
    %v545 = vpop.f32.mrf.mxu0
    %546 = vmatprep.mubr.bf16.mxu0 0
    %547 = vmatmul.mubr.bf16.gmra.mxu0 %v385
    %v548 = vpop.f32.mrf.mxu0
    %v549 = vadd.f32 %v416, %v548
    %v550 = vpop.f32.mrf.mxu0
    %v551 = vpop.f32.mrf.mxu0
    %v552 = vadd.f32 %v416, %v551
    %v553 = vpop.f32.mrf.mxu0
    %554 = vmatprep.mubr.bf16.mxu0 0
    %555 = vmatmul.mubr.bf16.gmra.mxu0 %v386
    %v556 = vpop.f32.mrf.mxu0
    %v557 = vadd.f32 %v416, %v556
    %v558 = vpop.f32.mrf.mxu0
    %v559 = vpop.f32.mrf.mxu0
    %v560 = vadd.f32 %v416, %v559
    %v561 = vpop.f32.mrf.mxu0
    %562 = vmatprep.mubr.bf16.mxu0 0
    %563 = vmatmul.mubr.bf16.gmra.mxu0 %v387
    %v564 = vpop.f32.mrf.mxu0
    %v565 = vadd.f32 %v416, %v564
    %v566 = vpop.f32.mrf.mxu0
    %v567 = vpop.f32.mrf.mxu0
    %v568 = vadd.f32 %v416, %v567
    %v569 = vpop.f32.mrf.mxu0
    %570 = vmatprep.mubr.bf16.mxu0 0
    %571 = vmatmul.mubr.bf16.gmra.mxu0 %v388
    %v572 = vpop.f32.mrf.mxu0
    %v573 = vadd.f32 %v416, %v572
    %v574 = vpop.f32.mrf.mxu0
    %v575 = vpop.f32.mrf.mxu0
    %v576 = vadd.f32 %v416, %v575
    %v577 = vpop.f32.mrf.mxu0
    %578 = vmatprep.mubr.bf16.mxu0 0
    %579 = vmatmul.mubr.bf16.gmra.mxu0 %v389
    %v580 = vpop.f32.mrf.mxu0
    %v581 = vadd.f32 %v416, %v580
    %v582 = vpop.f32.mrf.mxu0
    %v583 = vpop.f32.mrf.mxu0
    %v584 = vadd.f32 %v416, %v583
    %v585 = vpop.f32.mrf.mxu0
    %586 = vmatprep.mubr.bf16.mxu0 0
    %587 = vmatmul.mubr.bf16.gmra.mxu0 %v390
    %v588 = vpop.f32.mrf.mxu0
    %v589 = vadd.f32 %v416, %v588
    %v590 = vpop.f32.mrf.mxu0
    %v591 = vpop.f32.mrf.mxu0
    %v592 = vadd.f32 %v416, %v591
    %v593 = vpop.f32.mrf.mxu0
    %594 = vmatprep.mubr.bf16.mxu0 0
    %595 = vmatmul.mubr.bf16.gmra.mxu0 %v391
    %v596 = vpop.f32.mrf.mxu0
    %v597 = vadd.f32 %v416, %v596
    %v598 = vpop.f32.mrf.mxu0
    %v599 = vpop.f32.mrf.mxu0
    %v600 = vadd.f32 %v416, %v599
    %v601 = vpop.f32.mrf.mxu0
    %602 = vmatprep.mubr.bf16.mxu0 0
    %603 = vmatmul.mubr.bf16.gmra.mxu0 %v392
    %v604 = vpop.f32.mrf.mxu0
    %v605 = vadd.f32 %v416, %v604
    %v606 = vpop.f32.mrf.mxu0
    %v607 = vpop.f32.mrf.mxu0
    %v608 = vadd.f32 %v416, %v607
    %v609 = vpop.f32.mrf.mxu0
    %610 = vmatprep.mubr.bf16.mxu0 0
    %611 = vmatmul.mubr.bf16.gmra.mxu0 %v393
    %v612 = vpop.f32.mrf.mxu0
    %v613 = vadd.f32 %v416, %v612
    %v614 = vpop.f32.mrf.mxu0
    %v615 = vpop.f32.mrf.mxu0
    %v616 = vadd.f32 %v416, %v615
    %v617 = vpop.f32.mrf.mxu0
    %618 = vmatprep.mubr.bf16.mxu0 0
    %619 = vmatmul.mubr.bf16.gmra.mxu0 %v394
    %v620 = vpop.f32.mrf.mxu0
    %v621 = vadd.f32 %v416, %v620
    %v622 = vpop.f32.mrf.mxu0
    %v623 = vpop.f32.mrf.mxu0
    %v624 = vadd.f32 %v416, %v623
    %v625 = vpop.f32.mrf.mxu0
    %626 = vdwg.mxu0
    %v627 = vmax.f32 %v501, 0.0
    %v628 = vmax.f32 %v504, 0.0
    %v629 = vmax.f32 %v509, 0.0
    %v630 = vmax.f32 %v512, 0.0
    %v631 = vmax.f32 %v517, 0.0
    %v632 = vmax.f32 %v520, 0.0
    %v633 = vmax.f32 %v525, 0.0
    %v634 = vmax.f32 %v528, 0.0
    %v635 = vmax.f32 %v533, 0.0
    %v636 = vmax.f32 %v536, 0.0
    %v637 = vmax.f32 %v541, 0.0
    %v638 = vmax.f32 %v544, 0.0
    %v639 = vmax.f32 %v549, 0.0
    %v640 = vmax.f32 %v552, 0.0
    %v641 = vmax.f32 %v557, 0.0
    %v642 = vmax.f32 %v560, 0.0
    %v643 = vmax.f32 %v565, 0.0
    %v644 = vmax.f32 %v568, 0.0
    %v645 = vmax.f32 %v573, 0.0
    %v646 = vmax.f32 %v576, 0.0
    %v647 = vmax.f32 %v581, 0.0
    %v648 = vmax.f32 %v584, 0.0
    %v649 = vmax.f32 %v589, 0.0
    %v650 = vmax.f32 %v592, 0.0
    %v651 = vmax.f32 %v597, 0.0
    %v652 = vmax.f32 %v600, 0.0
    %v653 = vmax.f32 %v605, 0.0
    %v654 = vmax.f32 %v608, 0.0
    %v655 = vmax.f32 %v613, 0.0
    %v656 = vmax.f32 %v616, 0.0
    %v657 = vmax.f32 %v621, 0.0
    %v658 = vmax.f32 %v624, 0.0
    %v659 = vpack.c.bf16 %v628, %v627
    %v660 = vpack.c.bf16 %v630, %v629
    %v661 = vpack.c.bf16 %v632, %v631
    %v662 = vpack.c.bf16 %v634, %v633
    %v663 = vpack.c.bf16 %v636, %v635
    %v664 = vpack.c.bf16 %v638, %v637
    %v665 = vpack.c.bf16 %v640, %v639
    %v666 = vpack.c.bf16 %v642, %v641
    %v667 = vpack.c.bf16 %v644, %v643
    %v668 = vpack.c.bf16 %v646, %v645
    %v669 = vpack.c.bf16 %v648, %v647
    %v670 = vpack.c.bf16 %v650, %v649
    %v671 = vpack.c.bf16 %v652, %v651
    %v672 = vpack.c.bf16 %v654, %v653
    %v673 = vpack.c.bf16 %v656, %v655
    %v674 = vpack.c.bf16 %v658, %v657
    %v675 = vld [vmem:[%s5] sm:$0xf]
    %v676 = vld [vmem:[%s5 + $0x4] sm:$0xf]
    %v677 = vld [vmem:[%s5 + $0x8] sm:$0xf]
    %v678 = vld [vmem:[%s5 + $0xc] sm:$0xf]
    %v679 = vld [vmem:[%s5 + $0x10] sm:$0xf]
    %v680 = vld [vmem:[%s5 + $0x14] sm:$0xf]
    %v681 = vld [vmem:[%s5 + $0x18] sm:$0xf]
    %v682 = vld [vmem:[%s5 + $0x1c] sm:$0xf]
    %v683 = vld [vmem:[%s5 + $0x20] sm:$0xf]
    %v684 = vld [vmem:[%s5 + $0x24] sm:$0xf]
    %v685 = vld [vmem:[%s5 + $0x28] sm:$0xf]
    %v686 = vld [vmem:[%s5 + $0x2c] sm:$0xf]
    %v687 = vld [vmem:[%s5 + $0x30] sm:$0xf]
    %v688 = vld [vmem:[%s5 + $0x34] sm:$0xf]
    %v689 = vld [vmem:[%s5 + $0x38] sm:$0xf]
    %v690 = vld [vmem:[%s5 + $0x3c] sm:$0xf]
    %v691 = vld [vmem:[%s6] sm:$0x1]
    %v693 = vlaneseq
    %v694 = vshrl.u32 %v693, 7
    %v695 = vsub.s32 0, %v694
    %v696 = vrot.slane %v691, %v695
    %v714 = vunpack.c.l.b16 %v675
    %v715 = vunpack.c.l.b16 %v676
    %v716 = vunpack.c.l.b16 %v677
    %v717 = vunpack.c.l.b16 %v678
    %v718 = vunpack.c.l.b16 %v679
    %v719 = vunpack.c.l.b16 %v680
    %v720 = vunpack.c.l.b16 %v681
    %v721 = vunpack.c.l.b16 %v682
    %v722 = vunpack.c.l.b16 %v683
    %v723 = vunpack.c.l.b16 %v684
    %v724 = vunpack.c.l.b16 %v685
    %v725 = vunpack.c.l.b16 %v686
    %v726 = vunpack.c.l.b16 %v687
    %v727 = vunpack.c.l.b16 %v688
    %v728 = vunpack.c.l.b16 %v689
    %v729 = vunpack.c.l.b16 %v690
    %v730 = vpack.c.b16 %v715, %v714
    %v731 = vpack.c.b16 %v717, %v716
    %v732 = vpack.c.b16 %v719, %v718
    %v733 = vpack.c.b16 %v721, %v720
    %v734 = vpack.c.b16 %v723, %v722
    %v735 = vpack.c.b16 %v725, %v724
    %v736 = vpack.c.b16 %v727, %v726
    %v737 = vpack.c.b16 %v729, %v728
    %746 = vmatprep.subr.bf16.mxu0 0
    %747 = vmatpush1.bf16.msra.mxu0 %v737
    %748 = vmatprep.subr.bf16.mxu0 0
    %749 = vmatpush1.bf16.msra.mxu0 %v736
    %750 = vmatprep.subr.bf16.mxu0 0
    %751 = vmatpush1.bf16.msra.mxu0 %v735
    %752 = vmatprep.subr.bf16.mxu0 0
    %753 = vmatpush1.bf16.msra.mxu0 %v734
    %754 = vmatprep.subr.bf16.mxu0 0
    %755 = vmatpush1.bf16.msra.mxu0 %v733
    %756 = vmatprep.subr.bf16.mxu0 0
    %757 = vmatpush1.bf16.msra.mxu0 %v732
    %758 = vmatprep.subr.bf16.mxu0 0
    %759 = vmatpush1.bf16.msra.mxu0 %v731
    %760 = vmatprep.subr.bf16.mxu0 0
    %761 = vmatpush1.bf16.msra.mxu0 %v730
    %762 = vmatprep.subr.bf16.mxu0 0
    %763 = vmatpush2.bf16.msra.mxu0 0
    %764 = vmatprep.subr.bf16.mxu0 0
    %765 = vmatpush2.bf16.msra.mxu0 0
    %766 = vmatprep.subr.bf16.mxu0 0
    %767 = vmatpush2.bf16.msra.mxu0 0
    %768 = vmatprep.subr.bf16.mxu0 0
    %769 = vmatpush2.bf16.msra.mxu0 0
    %770 = vmatprep.subr.bf16.mxu0 0
    %771 = vmatpush2.bf16.msra.mxu0 0
    %772 = vmatprep.subr.bf16.mxu0 0
    %773 = vmatpush2.bf16.msra.mxu0 0
    %774 = vmatprep.subr.bf16.mxu0 0
    %775 = vmatpush2.bf16.msra.mxu0 0
    %776 = vmatprep.subr.bf16.mxu0 0
    %777 = vmatpush2.bf16.msra.mxu0 0
    %778 = vmatprep.mubr.bf16.mxu0 0
    %779 = vmatmul.mubr.bf16.gmra.mxu0 %v659
    %v780 = vpop.f32.mrf.mxu0
    %v781 = vadd.f32 %v696, %v780
    %v782 = vpop.f32.mrf.mxu0
    %v783 = vpop.f32.mrf.mxu0
    %v784 = vadd.f32 %v696, %v783
    %v785 = vpop.f32.mrf.mxu0
    %786 = vmatprep.mubr.bf16.mxu0 0
    %787 = vmatmul.mubr.bf16.gmra.mxu0 %v660
    %v788 = vpop.f32.mrf.mxu0
    %v789 = vadd.f32 %v696, %v788
    %v790 = vpop.f32.mrf.mxu0
    %v791 = vpop.f32.mrf.mxu0
    %v792 = vadd.f32 %v696, %v791
    %v793 = vpop.f32.mrf.mxu0
    %794 = vmatprep.mubr.bf16.mxu0 0
    %795 = vmatmul.mubr.bf16.gmra.mxu0 %v661
    %v796 = vpop.f32.mrf.mxu0
    %v797 = vadd.f32 %v696, %v796
    %v798 = vpop.f32.mrf.mxu0
    %v799 = vpop.f32.mrf.mxu0
    %v800 = vadd.f32 %v696, %v799
    %v801 = vpop.f32.mrf.mxu0
    %802 = vmatprep.mubr.bf16.mxu0 0
    %803 = vmatmul.mubr.bf16.gmra.mxu0 %v662
    %v804 = vpop.f32.mrf.mxu0
    %v805 = vadd.f32 %v696, %v804
    %v806 = vpop.f32.mrf.mxu0
    %v807 = vpop.f32.mrf.mxu0
    %v808 = vadd.f32 %v696, %v807
    %v809 = vpop.f32.mrf.mxu0
    %810 = vmatprep.mubr.bf16.mxu0 0
    %811 = vmatmul.mubr.bf16.gmra.mxu0 %v663
    %v812 = vpop.f32.mrf.mxu0
    %v813 = vadd.f32 %v696, %v812
    %v814 = vpop.f32.mrf.mxu0
    %v815 = vpop.f32.mrf.mxu0
    %v816 = vadd.f32 %v696, %v815
    %v817 = vpop.f32.mrf.mxu0
    %818 = vmatprep.mubr.bf16.mxu0 0
    %819 = vmatmul.mubr.bf16.gmra.mxu0 %v664
    %v820 = vpop.f32.mrf.mxu0
    %v821 = vadd.f32 %v696, %v820
    %v822 = vpop.f32.mrf.mxu0
    %v823 = vpop.f32.mrf.mxu0
    %v824 = vadd.f32 %v696, %v823
    %v825 = vpop.f32.mrf.mxu0
    %826 = vmatprep.mubr.bf16.mxu0 0
    %827 = vmatmul.mubr.bf16.gmra.mxu0 %v665
    %v828 = vpop.f32.mrf.mxu0
    %v829 = vadd.f32 %v696, %v828
    %v830 = vpop.f32.mrf.mxu0
    %v831 = vpop.f32.mrf.mxu0
    %v832 = vadd.f32 %v696, %v831
    %v833 = vpop.f32.mrf.mxu0
    %834 = vmatprep.mubr.bf16.mxu0 0
    %835 = vmatmul.mubr.bf16.gmra.mxu0 %v666
    %v836 = vpop.f32.mrf.mxu0
    %v837 = vadd.f32 %v696, %v836
    %v838 = vpop.f32.mrf.mxu0
    %v839 = vpop.f32.mrf.mxu0
    %v840 = vadd.f32 %v696, %v839
    %v841 = vpop.f32.mrf.mxu0
    %842 = vmatprep.mubr.bf16.mxu0 0
    %843 = vmatmul.mubr.bf16.gmra.mxu0 %v667
    %v844 = vpop.f32.mrf.mxu0
    %v845 = vadd.f32 %v696, %v844
    %v846 = vpop.f32.mrf.mxu0
    %v847 = vpop.f32.mrf.mxu0
    %v848 = vadd.f32 %v696, %v847
    %v849 = vpop.f32.mrf.mxu0
    %850 = vmatprep.mubr.bf16.mxu0 0
    %851 = vmatmul.mubr.bf16.gmra.mxu0 %v668
    %v852 = vpop.f32.mrf.mxu0
    %v853 = vadd.f32 %v696, %v852
    %v854 = vpop.f32.mrf.mxu0
    %v855 = vpop.f32.mrf.mxu0
    %v856 = vadd.f32 %v696, %v855
    %v857 = vpop.f32.mrf.mxu0
    %858 = vmatprep.mubr.bf16.mxu0 0
    %859 = vmatmul.mubr.bf16.gmra.mxu0 %v669
    %v860 = vpop.f32.mrf.mxu0
    %v861 = vadd.f32 %v696, %v860
    %v862 = vpop.f32.mrf.mxu0
    %v863 = vpop.f32.mrf.mxu0
    %v864 = vadd.f32 %v696, %v863
    %v865 = vpop.f32.mrf.mxu0
    %866 = vmatprep.mubr.bf16.mxu0 0
    %867 = vmatmul.mubr.bf16.gmra.mxu0 %v670
    %v868 = vpop.f32.mrf.mxu0
    %v869 = vadd.f32 %v696, %v868
    %v870 = vpop.f32.mrf.mxu0
    %v871 = vpop.f32.mrf.mxu0
    %v872 = vadd.f32 %v696, %v871
    %v873 = vpop.f32.mrf.mxu0
    %874 = vmatprep.mubr.bf16.mxu0 0
    %875 = vmatmul.mubr.bf16.gmra.mxu0 %v671
    %v876 = vpop.f32.mrf.mxu0
    %v877 = vadd.f32 %v696, %v876
    %v878 = vpop.f32.mrf.mxu0
    %v879 = vpop.f32.mrf.mxu0
    %v880 = vadd.f32 %v696, %v879
    %v881 = vpop.f32.mrf.mxu0
    %882 = vmatprep.mubr.bf16.mxu0 0
    %883 = vmatmul.mubr.bf16.gmra.mxu0 %v672
    %v884 = vpop.f32.mrf.mxu0
    %v885 = vadd.f32 %v696, %v884
    %v886 = vpop.f32.mrf.mxu0
    %v887 = vpop.f32.mrf.mxu0
    %v888 = vadd.f32 %v696, %v887
    %v889 = vpop.f32.mrf.mxu0
    %890 = vmatprep.mubr.bf16.mxu0 0
    %891 = vmatmul.mubr.bf16.gmra.mxu0 %v673
    %v892 = vpop.f32.mrf.mxu0
    %v893 = vadd.f32 %v696, %v892
    %v894 = vpop.f32.mrf.mxu0
    %v895 = vpop.f32.mrf.mxu0
    %v896 = vadd.f32 %v696, %v895
    %v897 = vpop.f32.mrf.mxu0
    %898 = vmatprep.mubr.bf16.mxu0 0
    %899 = vmatmul.mubr.bf16.gmra.mxu0 %v674
    %v900 = vpop.f32.mrf.mxu0
    %v901 = vadd.f32 %v696, %v900
    %v902 = vpop.f32.mrf.mxu0
    %v903 = vpop.f32.mrf.mxu0
    %v904 = vadd.f32 %v696, %v903
    %v905 = vpop.f32.mrf.mxu0
    %906 = vdwg.mxu0
    %v907 = vmax.f32 %v781, 0.0
    %v908 = vmax.f32 %v784, 0.0
    %v909 = vmax.f32 %v789, 0.0
    %v910 = vmax.f32 %v792, 0.0
    %v911 = vmax.f32 %v797, 0.0
    %v912 = vmax.f32 %v800, 0.0
    %v913 = vmax.f32 %v805, 0.0
    %v914 = vmax.f32 %v808, 0.0
    %v915 = vmax.f32 %v813, 0.0
    %v916 = vmax.f32 %v816, 0.0
    %v917 = vmax.f32 %v821, 0.0
    %v918 = vmax.f32 %v824, 0.0
    %v919 = vmax.f32 %v829, 0.0
    %v920 = vmax.f32 %v832, 0.0
    %v921 = vmax.f32 %v837, 0.0
    %v922 = vmax.f32 %v840, 0.0
    %v923 = vmax.f32 %v845, 0.0
    %v924 = vmax.f32 %v848, 0.0
    %v925 = vmax.f32 %v853, 0.0
    %v926 = vmax.f32 %v856, 0.0
    %v927 = vmax.f32 %v861, 0.0
    %v928 = vmax.f32 %v864, 0.0
    %v929 = vmax.f32 %v869, 0.0
    %v930 = vmax.f32 %v872, 0.0
    %v931 = vmax.f32 %v877, 0.0
    %v932 = vmax.f32 %v880, 0.0
    %v933 = vmax.f32 %v885, 0.0
    %v934 = vmax.f32 %v888, 0.0
    %v935 = vmax.f32 %v893, 0.0
    %v936 = vmax.f32 %v896, 0.0
    %v937 = vmax.f32 %v901, 0.0
    %v938 = vmax.f32 %v904, 0.0
    %v939 = vpack.c.bf16 %v908, %v907
    %v940 = vpack.c.bf16 %v910, %v909
    %v941 = vpack.c.bf16 %v912, %v911
    %v942 = vpack.c.bf16 %v914, %v913
    %v943 = vpack.c.bf16 %v916, %v915
    %v944 = vpack.c.bf16 %v918, %v917
    %v945 = vpack.c.bf16 %v920, %v919
    %v946 = vpack.c.bf16 %v922, %v921
    %v947 = vpack.c.bf16 %v924, %v923
    %v948 = vpack.c.bf16 %v926, %v925
    %v949 = vpack.c.bf16 %v928, %v927
    %v950 = vpack.c.bf16 %v930, %v929
    %v951 = vpack.c.bf16 %v932, %v931
    %v952 = vpack.c.bf16 %v934, %v933
    %v953 = vpack.c.bf16 %v936, %v935
    %v954 = vpack.c.bf16 %v938, %v937
    %v955 = vld [vmem:[%s7] sm:$0xf]
    %v956 = vld [vmem:[%s7 + $0x4] sm:$0xf]
    %v957 = vld [vmem:[%s7 + $0x8] sm:$0xf]
    %v958 = vld [vmem:[%s7 + $0xc] sm:$0xf]
    %v959 = vld [vmem:[%s7 + $0x10] sm:$0xf]
    %v960 = vld [vmem:[%s7 + $0x14] sm:$0xf]
    %v961 = vld [vmem:[%s7 + $0x18] sm:$0xf]
    %v962 = vld [vmem:[%s7 + $0x1c] sm:$0xf]
    %v963 = vld [vmem:[%s7 + $0x20] sm:$0xf]
    %v964 = vld [vmem:[%s7 + $0x24] sm:$0xf]
    %v965 = vld [vmem:[%s7 + $0x28] sm:$0xf]
    %v966 = vld [vmem:[%s7 + $0x2c] sm:$0xf]
    %v967 = vld [vmem:[%s7 + $0x30] sm:$0xf]
    %v968 = vld [vmem:[%s7 + $0x34] sm:$0xf]
    %v969 = vld [vmem:[%s7 + $0x38] sm:$0xf]
    %v970 = vld [vmem:[%s7 + $0x3c] sm:$0xf]
    %v971 = vld [vmem:[%s8] sm:$0x1]
    %v973 = vlaneseq
    %v974 = vshrl.u32 %v973, 7
    %v975 = vsub.s32 0, %v974
    %v976 = vrot.slane %v971, %v975
    %v994 = vunpack.c.l.b16 %v955
    %v995 = vunpack.c.l.b16 %v956
    %v996 = vunpack.c.l.b16 %v957
    %v997 = vunpack.c.l.b16 %v958
    %v998 = vunpack.c.l.b16 %v959
    %v999 = vunpack.c.l.b16 %v960
    %v1000 = vunpack.c.l.b16 %v961
    %v1001 = vunpack.c.l.b16 %v962
    %v1002 = vunpack.c.l.b16 %v963
    %v1003 = vunpack.c.l.b16 %v964
    %v1004 = vunpack.c.l.b16 %v965
    %v1005 = vunpack.c.l.b16 %v966
    %v1006 = vunpack.c.l.b16 %v967
    %v1007 = vunpack.c.l.b16 %v968
    %v1008 = vunpack.c.l.b16 %v969
    %v1009 = vunpack.c.l.b16 %v970
    %v1010 = vpack.c.b16 %v995, %v994
    %v1011 = vpack.c.b16 %v997, %v996
    %v1012 = vpack.c.b16 %v999, %v998
    %v1013 = vpack.c.b16 %v1001, %v1000
    %v1014 = vpack.c.b16 %v1003, %v1002
    %v1015 = vpack.c.b16 %v1005, %v1004
    %v1016 = vpack.c.b16 %v1007, %v1006
    %v1017 = vpack.c.b16 %v1009, %v1008
    %1026 = vmatprep.subr.bf16.mxu0 0
    %1027 = vmatpush1.bf16.msra.mxu0 %v1017
    %1028 = vmatprep.subr.bf16.mxu0 0
    %1029 = vmatpush1.bf16.msra.mxu0 %v1016
    %1030 = vmatprep.subr.bf16.mxu0 0
    %1031 = vmatpush1.bf16.msra.mxu0 %v1015
    %1032 = vmatprep.subr.bf16.mxu0 0
    %1033 = vmatpush1.bf16.msra.mxu0 %v1014
    %1034 = vmatprep.subr.bf16.mxu0 0
    %1035 = vmatpush1.bf16.msra.mxu0 %v1013
    %1036 = vmatprep.subr.bf16.mxu0 0
    %1037 = vmatpush1.bf16.msra.mxu0 %v1012
    %1038 = vmatprep.subr.bf16.mxu0 0
    %1039 = vmatpush1.bf16.msra.mxu0 %v1011
    %1040 = vmatprep.subr.bf16.mxu0 0
    %1041 = vmatpush1.bf16.msra.mxu0 %v1010
    %1042 = vmatprep.subr.bf16.mxu0 0
    %1043 = vmatpush2.bf16.msra.mxu0 0
    %1044 = vmatprep.subr.bf16.mxu0 0
    %1045 = vmatpush2.bf16.msra.mxu0 0
    %1046 = vmatprep.subr.bf16.mxu0 0
    %1047 = vmatpush2.bf16.msra.mxu0 0
    %1048 = vmatprep.subr.bf16.mxu0 0
    %1049 = vmatpush2.bf16.msra.mxu0 0
    %1050 = vmatprep.subr.bf16.mxu0 0
    %1051 = vmatpush2.bf16.msra.mxu0 0
    %1052 = vmatprep.subr.bf16.mxu0 0
    %1053 = vmatpush2.bf16.msra.mxu0 0
    %1054 = vmatprep.subr.bf16.mxu0 0
    %1055 = vmatpush2.bf16.msra.mxu0 0
    %1056 = vmatprep.subr.bf16.mxu0 0
    %1057 = vmatpush2.bf16.msra.mxu0 0
    %1058 = vmatprep.mubr.bf16.mxu0 0
    %1059 = vmatmul.mubr.bf16.gmra.mxu0 %v939
    %v1060 = vpop.f32.mrf.mxu0
    %v1061 = vadd.f32 %v976, %v1060
    %v1062 = vpop.f32.mrf.mxu0
    %v1063 = vpop.f32.mrf.mxu0
    %v1064 = vadd.f32 %v976, %v1063
    %v1065 = vpop.f32.mrf.mxu0
    %1066 = vmatprep.mubr.bf16.mxu0 0
    %1067 = vmatmul.mubr.bf16.gmra.mxu0 %v940
    %v1068 = vpop.f32.mrf.mxu0
    %v1069 = vadd.f32 %v976, %v1068
    %v1070 = vpop.f32.mrf.mxu0
    %v1071 = vpop.f32.mrf.mxu0
    %v1072 = vadd.f32 %v976, %v1071
    %v1073 = vpop.f32.mrf.mxu0
    %1074 = vmatprep.mubr.bf16.mxu0 0
    %1075 = vmatmul.mubr.bf16.gmra.mxu0 %v941
    %v1076 = vpop.f32.mrf.mxu0
    %v1077 = vadd.f32 %v976, %v1076
    %v1078 = vpop.f32.mrf.mxu0
    %v1079 = vpop.f32.mrf.mxu0
    %v1080 = vadd.f32 %v976, %v1079
    %v1081 = vpop.f32.mrf.mxu0
    %1082 = vmatprep.mubr.bf16.mxu0 0
    %1083 = vmatmul.mubr.bf16.gmra.mxu0 %v942
    %v1084 = vpop.f32.mrf.mxu0
    %v1085 = vadd.f32 %v976, %v1084
    %v1086 = vpop.f32.mrf.mxu0
    %v1087 = vpop.f32.mrf.mxu0
    %v1088 = vadd.f32 %v976, %v1087
    %v1089 = vpop.f32.mrf.mxu0
    %1090 = vmatprep.mubr.bf16.mxu0 0
    %1091 = vmatmul.mubr.bf16.gmra.mxu0 %v943
    %v1092 = vpop.f32.mrf.mxu0
    %v1093 = vadd.f32 %v976, %v1092
    %v1094 = vpop.f32.mrf.mxu0
    %v1095 = vpop.f32.mrf.mxu0
    %v1096 = vadd.f32 %v976, %v1095
    %v1097 = vpop.f32.mrf.mxu0
    %1098 = vmatprep.mubr.bf16.mxu0 0
    %1099 = vmatmul.mubr.bf16.gmra.mxu0 %v944
    %v1100 = vpop.f32.mrf.mxu0
    %v1101 = vadd.f32 %v976, %v1100
    %v1102 = vpop.f32.mrf.mxu0
    %v1103 = vpop.f32.mrf.mxu0
    %v1104 = vadd.f32 %v976, %v1103
    %v1105 = vpop.f32.mrf.mxu0
    %1106 = vmatprep.mubr.bf16.mxu0 0
    %1107 = vmatmul.mubr.bf16.gmra.mxu0 %v945
    %v1108 = vpop.f32.mrf.mxu0
    %v1109 = vadd.f32 %v976, %v1108
    %v1110 = vpop.f32.mrf.mxu0
    %v1111 = vpop.f32.mrf.mxu0
    %v1112 = vadd.f32 %v976, %v1111
    %v1113 = vpop.f32.mrf.mxu0
    %1114 = vmatprep.mubr.bf16.mxu0 0
    %1115 = vmatmul.mubr.bf16.gmra.mxu0 %v946
    %v1116 = vpop.f32.mrf.mxu0
    %v1117 = vadd.f32 %v976, %v1116
    %v1118 = vpop.f32.mrf.mxu0
    %v1119 = vpop.f32.mrf.mxu0
    %v1120 = vadd.f32 %v976, %v1119
    %v1121 = vpop.f32.mrf.mxu0
    %1122 = vmatprep.mubr.bf16.mxu0 0
    %1123 = vmatmul.mubr.bf16.gmra.mxu0 %v947
    %v1124 = vpop.f32.mrf.mxu0
    %v1125 = vadd.f32 %v976, %v1124
    %v1126 = vpop.f32.mrf.mxu0
    %v1127 = vpop.f32.mrf.mxu0
    %v1128 = vadd.f32 %v976, %v1127
    %v1129 = vpop.f32.mrf.mxu0
    %1130 = vmatprep.mubr.bf16.mxu0 0
    %1131 = vmatmul.mubr.bf16.gmra.mxu0 %v948
    %v1132 = vpop.f32.mrf.mxu0
    %v1133 = vadd.f32 %v976, %v1132
    %v1134 = vpop.f32.mrf.mxu0
    %v1135 = vpop.f32.mrf.mxu0
    %v1136 = vadd.f32 %v976, %v1135
    %v1137 = vpop.f32.mrf.mxu0
    %1138 = vmatprep.mubr.bf16.mxu0 0
    %1139 = vmatmul.mubr.bf16.gmra.mxu0 %v949
    %v1140 = vpop.f32.mrf.mxu0
    %v1141 = vadd.f32 %v976, %v1140
    %v1142 = vpop.f32.mrf.mxu0
    %v1143 = vpop.f32.mrf.mxu0
    %v1144 = vadd.f32 %v976, %v1143
    %v1145 = vpop.f32.mrf.mxu0
    %1146 = vmatprep.mubr.bf16.mxu0 0
    %1147 = vmatmul.mubr.bf16.gmra.mxu0 %v950
    %v1148 = vpop.f32.mrf.mxu0
    %v1149 = vadd.f32 %v976, %v1148
    %v1150 = vpop.f32.mrf.mxu0
    %v1151 = vpop.f32.mrf.mxu0
    %v1152 = vadd.f32 %v976, %v1151
    %v1153 = vpop.f32.mrf.mxu0
    %1154 = vmatprep.mubr.bf16.mxu0 0
    %1155 = vmatmul.mubr.bf16.gmra.mxu0 %v951
    %v1156 = vpop.f32.mrf.mxu0
    %v1157 = vadd.f32 %v976, %v1156
    %v1158 = vpop.f32.mrf.mxu0
    %v1159 = vpop.f32.mrf.mxu0
    %v1160 = vadd.f32 %v976, %v1159
    %v1161 = vpop.f32.mrf.mxu0
    %1162 = vmatprep.mubr.bf16.mxu0 0
    %1163 = vmatmul.mubr.bf16.gmra.mxu0 %v952
    %v1164 = vpop.f32.mrf.mxu0
    %v1165 = vadd.f32 %v976, %v1164
    %v1166 = vpop.f32.mrf.mxu0
    %v1167 = vpop.f32.mrf.mxu0
    %v1168 = vadd.f32 %v976, %v1167
    %v1169 = vpop.f32.mrf.mxu0
    %1170 = vmatprep.mubr.bf16.mxu0 0
    %1171 = vmatmul.mubr.bf16.gmra.mxu0 %v953
    %v1172 = vpop.f32.mrf.mxu0
    %v1173 = vadd.f32 %v976, %v1172
    %v1174 = vpop.f32.mrf.mxu0
    %v1175 = vpop.f32.mrf.mxu0
    %v1176 = vadd.f32 %v976, %v1175
    %v1177 = vpop.f32.mrf.mxu0
    %1178 = vmatprep.mubr.bf16.mxu0 0
    %1179 = vmatmul.mubr.bf16.gmra.mxu0 %v954
    %v1180 = vpop.f32.mrf.mxu0
    %v1181 = vadd.f32 %v976, %v1180
    %v1182 = vpop.f32.mrf.mxu0
    %v1183 = vpop.f32.mrf.mxu0
    %v1184 = vadd.f32 %v976, %v1183
    %v1185 = vpop.f32.mrf.mxu0
    %1186 = vdwg.mxu0
    %v1187 = vpack.c.bf16 %v1064, %v1061
    %v1188 = vpack.c.bf16 %v1072, %v1069
    %v1189 = vpack.c.bf16 %v1080, %v1077
    %v1190 = vpack.c.bf16 %v1088, %v1085
    %v1191 = vpack.c.bf16 %v1096, %v1093
    %v1192 = vpack.c.bf16 %v1104, %v1101
    %v1193 = vpack.c.bf16 %v1112, %v1109
    %v1194 = vpack.c.bf16 %v1120, %v1117
    %v1195 = vpack.c.bf16 %v1128, %v1125
    %v1196 = vpack.c.bf16 %v1136, %v1133
    %v1197 = vpack.c.bf16 %v1144, %v1141
    %v1198 = vpack.c.bf16 %v1152, %v1149
    %v1199 = vpack.c.bf16 %v1160, %v1157
    %v1200 = vpack.c.bf16 %v1168, %v1165
    %v1201 = vpack.c.bf16 %v1176, %v1173
    %v1202 = vpack.c.bf16 %v1184, %v1181
    %v1219 = vunpack.c.l.b16 %v1187
    %v1220 = vunpack.c.h.b16 %v1187
    %v1221 = vunpack.c.l.b16 %v1188
    %v1222 = vunpack.c.h.b16 %v1188
    %v1223 = vunpack.c.l.b16 %v1189
    %v1224 = vunpack.c.h.b16 %v1189
    %v1225 = vunpack.c.l.b16 %v1190
    %v1226 = vunpack.c.h.b16 %v1190
    %v1227 = vunpack.c.l.b16 %v1191
    %v1228 = vunpack.c.h.b16 %v1191
    %v1229 = vunpack.c.l.b16 %v1192
    %v1230 = vunpack.c.h.b16 %v1192
    %v1231 = vunpack.c.l.b16 %v1193
    %v1232 = vunpack.c.h.b16 %v1193
    %v1233 = vunpack.c.l.b16 %v1194
    %v1234 = vunpack.c.h.b16 %v1194
    %v1235 = vunpack.c.l.b16 %v1195
    %v1236 = vunpack.c.h.b16 %v1195
    %v1237 = vunpack.c.l.b16 %v1196
    %v1238 = vunpack.c.h.b16 %v1196
    %v1239 = vunpack.c.l.b16 %v1197
    %v1240 = vunpack.c.h.b16 %v1197
    %v1241 = vunpack.c.l.b16 %v1198
    %v1242 = vunpack.c.h.b16 %v1198
    %v1243 = vunpack.c.l.b16 %v1199
    %v1244 = vunpack.c.h.b16 %v1199
    %v1245 = vunpack.c.l.b16 %v1200
    %v1246 = vunpack.c.h.b16 %v1200
    %v1247 = vunpack.c.l.b16 %v1201
    %v1248 = vunpack.c.h.b16 %v1201
    %v1249 = vunpack.c.l.b16 %v1202
    %v1250 = vunpack.c.h.b16 %v1202
    %v1251 = vpack.c.b16 %v1219, %v1219
    %v1252 = vpack.c.b16 %v1220, %v1220
    %v1253 = vpack.c.b16 %v1221, %v1221
    %v1254 = vpack.c.b16 %v1222, %v1222
    %v1255 = vpack.c.b16 %v1223, %v1223
    %v1256 = vpack.c.b16 %v1224, %v1224
    %v1257 = vpack.c.b16 %v1225, %v1225
    %v1258 = vpack.c.b16 %v1226, %v1226
    %v1259 = vpack.c.b16 %v1227, %v1227
    %v1260 = vpack.c.b16 %v1228, %v1228
    %v1261 = vpack.c.b16 %v1229, %v1229
    %v1262 = vpack.c.b16 %v1230, %v1230
    %v1263 = vpack.c.b16 %v1231, %v1231
    %v1264 = vpack.c.b16 %v1232, %v1232
    %v1265 = vpack.c.b16 %v1233, %v1233
    %v1266 = vpack.c.b16 %v1234, %v1234
    %v1267 = vpack.c.b16 %v1235, %v1235
    %v1268 = vpack.c.b16 %v1236, %v1236
    %v1269 = vpack.c.b16 %v1237, %v1237
    %v1270 = vpack.c.b16 %v1238, %v1238
    %v1271 = vpack.c.b16 %v1239, %v1239
    %v1272 = vpack.c.b16 %v1240, %v1240
    %v1273 = vpack.c.b16 %v1241, %v1241
    %v1274 = vpack.c.b16 %v1242, %v1242
    %v1275 = vpack.c.b16 %v1243, %v1243
    %v1276 = vpack.c.b16 %v1244, %v1244
    %v1277 = vpack.c.b16 %v1245, %v1245
    %v1278 = vpack.c.b16 %v1246, %v1246
    %v1279 = vpack.c.b16 %v1247, %v1247
    %v1280 = vpack.c.b16 %v1248, %v1248
    %v1281 = vpack.c.b16 %v1249, %v1249
    %v1282 = vpack.c.b16 %v1250, %v1250
    %1315 = vst [vmem:[#allocation2] sm:$0xf] %v1251
    %1316 = vst [vmem:[#allocation2 + $0x4] sm:$0xf] %v1252
    %1317 = vst [vmem:[#allocation2 + $0x8] sm:$0xf] %v1253
    %1318 = vst [vmem:[#allocation2 + $0xc] sm:$0xf] %v1254
    %1319 = vst [vmem:[#allocation2 + $0x10] sm:$0xf] %v1255
    %1320 = vst [vmem:[#allocation2 + $0x14] sm:$0xf] %v1256
    %1321 = vst [vmem:[#allocation2 + $0x18] sm:$0xf] %v1257
    %1322 = vst [vmem:[#allocation2 + $0x1c] sm:$0xf] %v1258
    %1323 = vst [vmem:[#allocation2 + $0x20] sm:$0xf] %v1259
    %1324 = vst [vmem:[#allocation2 + $0x24] sm:$0xf] %v1260
    %1325 = vst [vmem:[#allocation2 + $0x28] sm:$0xf] %v1261
    %1326 = vst [vmem:[#allocation2 + $0x2c] sm:$0xf] %v1262
    %1327 = vst [vmem:[#allocation2 + $0x30] sm:$0xf] %v1263
    %1328 = vst [vmem:[#allocation2 + $0x34] sm:$0xf] %v1264
    %1329 = vst [vmem:[#allocation2 + $0x38] sm:$0xf] %v1265
    %1330 = vst [vmem:[#allocation2 + $0x3c] sm:$0xf] %v1266
    %1331 = vst [vmem:[#allocation2 + $0x40] sm:$0xf] %v1267
    %1332 = vst [vmem:[#allocation2 + $0x44] sm:$0xf] %v1268
    %1333 = vst [vmem:[#allocation2 + $0x48] sm:$0xf] %v1269
    %1334 = vst [vmem:[#allocation2 + $0x4c] sm:$0xf] %v1270
    %1335 = vst [vmem:[#allocation2 + $0x50] sm:$0xf] %v1271
    %1336 = vst [vmem:[#allocation2 + $0x54] sm:$0xf] %v1272
    %1337 = vst [vmem:[#allocation2 + $0x58] sm:$0xf] %v1273
    %1338 = vst [vmem:[#allocation2 + $0x5c] sm:$0xf] %v1274
    %1339 = vst [vmem:[#allocation2 + $0x60] sm:$0xf] %v1275
    %1340 = vst [vmem:[#allocation2 + $0x64] sm:$0xf] %v1276
    %1341 = vst [vmem:[#allocation2 + $0x68] sm:$0xf] %v1277
    %1342 = vst [vmem:[#allocation2 + $0x6c] sm:$0xf] %v1278
    %1343 = vst [vmem:[#allocation2 + $0x70] sm:$0xf] %v1279
    %1344 = vst [vmem:[#allocation2 + $0x74] sm:$0xf] %v1280
    %1345 = vst [vmem:[#allocation2 + $0x78] sm:$0xf] %v1281
    %1346 = vst [vmem:[#allocation2 + $0x7c] sm:$0xf] %v1282
    // Predicated region
    $region38: #{tpu_custom_call.1} parent=1 // pred_check
      _
    $region39: #{tpu_custom_call.1} parent=1 // pred_check_branch
      %1348 = sbr.rel (0) target = $region41
    $region40: #{tpu_custom_call.1} parent=1 // pred_region
      %s1350 = ssub.s32 2048, 2048
      %1351 = vsyncadd [#allocation3], %s1350
      %s1352 = sshll.u32 [#allocation2], 4
      %s1353 = int_to_ptr.vmem [resolvable:$true] %s1352
      %1358 = dma.vmem_to_hbm [thread:$0]  %s1353, 2048, %s9, [#allocation3], 64, 64, 4
    $region41: #{tpu_custom_call.1} parent=1 // pred_fallthru
      _
    // Predicated region
    $region42: #{tpu_custom_call.1} parent=1 // pred_check
      _
    $region43: #{tpu_custom_call.1} parent=1 // pred_check_branch
      %1360 = sbr.rel (0) target = $region45
    $region44: #{tpu_custom_call.1} parent=1 // pred_region
      %1361 = dma.done [#allocation3], 2048
    $region45: #{tpu_custom_call.1} parent=1 // pred_fallthru
      _
    %1362 = vsyncpa [#allocation3], 1

// kernel: tpu_custom_call.1
$region0: #{tpu_custom_call.1}
  #allocation0 [shape = 'u32[]', space=smem, size = 0x4, offset = 0x4, fixed_abs, tag = 'smem constant byte address 0x4 - core index']
  #allocation1 [shape = 'u32[144,128]{1,0:T(1,128)}', space=vmem, size = 0x12000, scoped, tag = 'internal scratch']
  %s0 = inlined_call_operand.vmem [shape: f32[256,96], index: 0, kind: input, shape index: {}]
  %s1 = inlined_call_operand.vmem [shape: bf16[96,128], index: 1, kind: input, shape index: {}]
  %s2 = inlined_call_operand.vmem [shape: f32[1,128], index: 2, kind: input, shape index: {}]
  %s3 = inlined_call_operand.vmem [shape: bf16[128,128], index: 3, kind: input, shape index: {}]
  %s4 = inlined_call_operand.vmem [shape: f32[1,128], index: 4, kind: input, shape index: {}]
  %s5 = inlined_call_operand.vmem [shape: bf16[128,128], index: 5, kind: input, shape index: {}]
  %s6 = inlined_call_operand.vmem [shape: f32[1,128], index: 6, kind: input, shape index: {}]
  %s7 = inlined_call_operand.vmem [shape: bf16[128,128], index: 7, kind: input, shape index: {}]
  %s8 = inlined_call_operand.vmem [shape: f32[1,128], index: 8, kind: input, shape index: {}]
  %s9 = inlined_call_operand.hbm [shape: bf16[256,128], index: 9, kind: output, shape index: {}]
  %s10 = sld [smem:[#allocation0]]
  $region46: #{tpu_custom_call.1} parent=0
    _
  %s12 = ssub.s32 1, %s10
  %s13 = scalar_select 0, %s12, %s10
  $region1: #{tpu_custom_call.1} parent=0
    #allocation2 [shape = 'u8[65536]{0}', space=vmem, size = 0x10000, scoped, tag = 'output window, operand 0, single buffered']
    #allocation3 [shape = 's32[1]{0}', space=sflag, size = 0x4, scoped, tag = 'scoped memory for tpu_custom_call.1']
    %14 = vsyncpa [#allocation3], 0
    // Predicated region
    $region2: #{tpu_custom_call.1} parent=1 // pred_check
      _
    $region3: #{tpu_custom_call.1} parent=1 // pred_check_branch
      %16 = sbr.rel (0) target = $region5
    $region4: #{tpu_custom_call.1} parent=1 // pred_region
      _
    $region5: #{tpu_custom_call.1} parent=1 // pred_fallthru
      _
    // Predicated region
    $region6: #{tpu_custom_call.1} parent=1 // pred_check
      _
    $region7: #{tpu_custom_call.1} parent=1 // pred_check_branch
      %18 = sbr.rel (0) target = $region9
    $region8: #{tpu_custom_call.1} parent=1 // pred_region
      _
    $region9: #{tpu_custom_call.1} parent=1 // pred_fallthru
      _
    // Predicated region
    $region10: #{tpu_custom_call.1} parent=1 // pred_check
      _
    $region11: #{tpu_custom_call.1} parent=1 // pred_check_branch
      %20 = sbr.rel (0) target = $region13
    $region12: #{tpu_custom_call.1} parent=1 // pred_region
      _
    $region13: #{tpu_custom_call.1} parent=1 // pred_fallthru
      _
    // Predicated region
    $region14: #{tpu_custom_call.1} parent=1 // pred_check
      _
    $region15: #{tpu_custom_call.1} parent=1 // pred_check_branch
      %22 = sbr.rel (0) target = $region17
    $region16: #{tpu_custom_call.1} parent=1 // pred_region
      _
    $region17: #{tpu_custom_call.1} parent=1 // pred_fallthru
      _
    // Predicated region
    $region18: #{tpu_custom_call.1} parent=1 // pred_check
      _
    $region19: #{tpu_custom_call.1} parent=1 // pred_check_branch
      %24 = sbr.rel (0) target = $region21
    $region20: #{tpu_custom_call.1} parent=1 // pred_region
      _
    $region21: #{tpu_custom_call.1} parent=1 // pred_fallthru
      _
    // Predicated region
    $region22: #{tpu_custom_call.1} parent=1 // pred_check
      _
    $region23: #{tpu_custom_call.1} parent=1 // pred_check_branch
      %26 = sbr.rel (0) target = $region25
    $region24: #{tpu_custom_call.1} parent=1 // pred_region
      _
    $region25: #{tpu_custom_call.1} parent=1 // pred_fallthru
      _
    // Predicated region
    $region26: #{tpu_custom_call.1} parent=1 // pred_check
      _
    $region27: #{tpu_custom_call.1} parent=1 // pred_check_branch
      %28 = sbr.rel (0) target = $region29
    $region28: #{tpu_custom_call.1} parent=1 // pred_region
      _
    $region29: #{tpu_custom_call.1} parent=1 // pred_fallthru
      _
    // Predicated region
    $region30: #{tpu_custom_call.1} parent=1 // pred_check
      _
    $region31: #{tpu_custom_call.1} parent=1 // pred_check_branch
      %30 = sbr.rel (0) target = $region33
    $region32: #{tpu_custom_call.1} parent=1 // pred_region
      _
    $region33: #{tpu_custom_call.1} parent=1 // pred_fallthru
      _
    // Predicated region
    $region34: #{tpu_custom_call.1} parent=1 // pred_check
      _
    $region35: #{tpu_custom_call.1} parent=1 // pred_check_branch
      %32 = sbr.rel (0) target = $region37
    $region36: #{tpu_custom_call.1} parent=1 // pred_region
      _
    $region37: #{tpu_custom_call.1} parent=1 // pred_fallthru
      _
    %v34 = vld [vmem:[%s0] sm:$0xff]
    %v35 = vld [vmem:[%s0 + $0x8] sm:$0xff]
    %v36 = vld [vmem:[%s0 + $0x10] sm:$0xff]
    %v37 = vld [vmem:[%s0 + $0x18] sm:$0xff]
    %v38 = vld [vmem:[%s0 + $0x20] sm:$0xff]
    %v39 = vld [vmem:[%s0 + $0x28] sm:$0xff]
    %v40 = vld [vmem:[%s0 + $0x30] sm:$0xff]
    %v41 = vld [vmem:[%s0 + $0x38] sm:$0xff]
    %v42 = vld [vmem:[%s0 + $0x40] sm:$0xff]
    %v43 = vld [vmem:[%s0 + $0x48] sm:$0xff]
    %v44 = vld [vmem:[%s0 + $0x50] sm:$0xff]
    %v45 = vld [vmem:[%s0 + $0x58] sm:$0xff]
    %v46 = vld [vmem:[%s0 + $0x60] sm:$0xff]
    %v47 = vld [vmem:[%s0 + $0x68] sm:$0xff]
    %v48 = vld [vmem:[%s0 + $0x70] sm:$0xff]
    %v49 = vld [vmem:[%s0 + $0x78] sm:$0xff]
    %v50 = vld [vmem:[%s0 + $0x80] sm:$0xff]
    %v51 = vld [vmem:[%s0 + $0x88] sm:$0xff]
    %v52 = vld [vmem:[%s0 + $0x90] sm:$0xff]
    %v53 = vld [vmem:[%s0 + $0x98] sm:$0xff]
    %v54 = vld [vmem:[%s0 + $0xa0] sm:$0xff]
    %v55 = vld [vmem:[%s0 + $0xa8] sm:$0xff]
    %v56 = vld [vmem:[%s0 + $0xb0] sm:$0xff]
    %v57 = vld [vmem:[%s0 + $0xb8] sm:$0xff]
    %v58 = vld [vmem:[%s0 + $0xc0] sm:$0xff]
    %v59 = vld [vmem:[%s0 + $0xc8] sm:$0xff]
    %v60 = vld [vmem:[%s0 + $0xd0] sm:$0xff]
    %v61 = vld [vmem:[%s0 + $0xd8] sm:$0xff]
    %v62 = vld [vmem:[%s0 + $0xe0] sm:$0xff]
    %v63 = vld [vmem:[%s0 + $0xe8] sm:$0xff]
    %v64 = vld [vmem:[%s0 + $0xf0] sm:$0xff]
    %v65 = vld [vmem:[%s0 + $0xf8] sm:$0xff]
    %v66 = vpack.c.bf16 %v35, %v34
    %v67 = vpack.c.bf16 %v37, %v36
    %v68 = vpack.c.bf16 %v39, %v38
    %v69 = vpack.c.bf16 %v41, %v40
    %v70 = vpack.c.bf16 %v43, %v42
    %v71 = vpack.c.bf16 %v45, %v44
    %v72 = vpack.c.bf16 %v47, %v46
    %v73 = vpack.c.bf16 %v49, %v48
    %v74 = vpack.c.bf16 %v51, %v50
    %v75 = vpack.c.bf16 %v53, %v52
    %v76 = vpack.c.bf16 %v55, %v54
    %v77 = vpack.c.bf16 %v57, %v56
    %v78 = vpack.c.bf16 %v59, %v58
    %v79 = vpack.c.bf16 %v61, %v60
    %v80 = vpack.c.bf16 %v63, %v62
    %v81 = vpack.c.bf16 %v65, %v64
    %v82 = vld [vmem:[%s1] sm:$0xf]
    %v83 = vld [vmem:[%s1 + $0x4] sm:$0xf]
    %v84 = vld [vmem:[%s1 + $0x8] sm:$0xf]
    %v85 = vld [vmem:[%s1 + $0xc] sm:$0xf]
    %v86 = vld [vmem:[%s1 + $0x10] sm:$0xf]
    %v87 = vld [vmem:[%s1 + $0x14] sm:$0xf]
    %v88 = vld [vmem:[%s1 + $0x18] sm:$0xf]
    %v89 = vld [vmem:[%s1 + $0x1c] sm:$0xf]
    %v90 = vld [vmem:[%s1 + $0x20] sm:$0xf]
    %v91 = vld [vmem:[%s1 + $0x24] sm:$0xf]
    %v92 = vld [vmem:[%s1 + $0x28] sm:$0xf]
    %v93 = vld [vmem:[%s1 + $0x2c] sm:$0xf]
    %v94 = vld [vmem:[%s2] sm:$0x1]
    %v96 = vlaneseq
    %v97 = vshrl.u32 %v96, 7
    %v98 = vsub.s32 0, %v97
    %v99 = vrot.slane %v94, %v98
    %v113 = vunpack.c.l.b16 %v82
    %v114 = vunpack.c.l.b16 %v83
    %v115 = vunpack.c.l.b16 %v84
    %v116 = vunpack.c.l.b16 %v85
    %v117 = vunpack.c.l.b16 %v86
    %v118 = vunpack.c.l.b16 %v87
    %v119 = vunpack.c.l.b16 %v88
    %v120 = vunpack.c.l.b16 %v89
    %v121 = vunpack.c.l.b16 %v90
    %v122 = vunpack.c.l.b16 %v91
    %v123 = vunpack.c.l.b16 %v92
    %v124 = vunpack.c.l.b16 %v93
    %v125 = vpack.c.b16 %v114, %v113
    %v126 = vpack.c.b16 %v116, %v115
    %v127 = vpack.c.b16 %v118, %v117
    %v128 = vpack.c.b16 %v120, %v119
    %v129 = vpack.c.b16 %v122, %v121
    %v130 = vpack.c.b16 %v124, %v123
    %vm137 = vcmask 785408
    %v139 = vsel %vm137, %v66, 0
    %v142 = vsel %vm137, %v67, 0
    %v145 = vsel %vm137, %v68, 0
    %v148 = vsel %vm137, %v69, 0
    %v151 = vsel %vm137, %v70, 0
    %v154 = vsel %vm137, %v71, 0
    %v157 = vsel %vm137, %v72, 0
    %v160 = vsel %vm137, %v73, 0
    %v163 = vsel %vm137, %v74, 0
    %v166 = vsel %vm137, %v75, 0
    %v169 = vsel %vm137, %v76, 0
    %v172 = vsel %vm137, %v77, 0
    %v175 = vsel %vm137, %v78, 0
    %v178 = vsel %vm137, %v79, 0
    %v181 = vsel %vm137, %v80, 0
    %v184 = vsel %vm137, %v81, 0
    %186 = vmatprep.subr.bf16.mxu0 0
    %187 = vmatpush1.bf16.msra.mxu0 0
    %188 = vmatprep.subr.bf16.mxu0 0
    %189 = vmatpush1.bf16.msra.mxu0 0
    %190 = vmatprep.subr.bf16.mxu0 0
    %191 = vmatpush1.bf16.msra.mxu0 %v130
    %192 = vmatprep.subr.bf16.mxu0 0
    %193 = vmatpush1.bf16.msra.mxu0 %v129
    %194 = vmatprep.subr.bf16.mxu0 0
    %195 = vmatpush1.bf16.msra.mxu0 %v128
    %196 = vmatprep.subr.bf16.mxu0 0
    %197 = vmatpush1.bf16.msra.mxu0 %v127
    %198 = vmatprep.subr.bf16.mxu0 0
    %199 = vmatpush1.bf16.msra.mxu0 %v126
    %200 = vmatprep.subr.bf16.mxu0 0
    %201 = vmatpush1.bf16.msra.mxu0 %v125
    %202 = vmatprep.subr.bf16.mxu0 0
    %203 = vmatpush2.bf16.msra.mxu0 0
    %204 = vmatprep.subr.bf16.mxu0 0
    %205 = vmatpush2.bf16.msra.mxu0 0
    %206 = vmatprep.subr.bf16.mxu0 0
    %207 = vmatpush2.bf16.msra.mxu0 0
    %208 = vmatprep.subr.bf16.mxu0 0
    %209 = vmatpush2.bf16.msra.mxu0 0
    %210 = vmatprep.subr.bf16.mxu0 0
    %211 = vmatpush2.bf16.msra.mxu0 0
    %212 = vmatprep.subr.bf16.mxu0 0
    %213 = vmatpush2.bf16.msra.mxu0 0
    %214 = vmatprep.subr.bf16.mxu0 0
    %215 = vmatpush2.bf16.msra.mxu0 0
    %216 = vmatprep.subr.bf16.mxu0 0
    %217 = vmatpush2.bf16.msra.mxu0 0
    %218 = vmatprep.mubr.bf16.mxu0 0
    %219 = vmatmul.mubr.bf16.gmra.mxu0 %v139
    %v220 = vpop.f32.mrf.mxu0
    %v221 = vadd.f32 %v99, %v220
    %v222 = vpop.f32.mrf.mxu0
    %v223 = vpop.f32.mrf.mxu0
    %v224 = vadd.f32 %v99, %v223
    %v225 = vpop.f32.mrf.mxu0
    %226 = vmatprep.mubr.bf16.mxu0 0
    %227 = vmatmul.mubr.bf16.gmra.mxu0 %v142
    %v228 = vpop.f32.mrf.mxu0
    %v229 = vadd.f32 %v99, %v228
    %v230 = vpop.f32.mrf.mxu0
    %v231 = vpop.f32.mrf.mxu0
    %v232 = vadd.f32 %v99, %v231
    %v233 = vpop.f32.mrf.mxu0
    %234 = vmatprep.mubr.bf16.mxu0 0
    %235 = vmatmul.mubr.bf16.gmra.mxu0 %v145
    %v236 = vpop.f32.mrf.mxu0
    %v237 = vadd.f32 %v99, %v236
    %v238 = vpop.f32.mrf.mxu0
    %v239 = vpop.f32.mrf.mxu0
    %v240 = vadd.f32 %v99, %v239
    %v241 = vpop.f32.mrf.mxu0
    %242 = vmatprep.mubr.bf16.mxu0 0
    %243 = vmatmul.mubr.bf16.gmra.mxu0 %v148
    %v244 = vpop.f32.mrf.mxu0
    %v245 = vadd.f32 %v99, %v244
    %v246 = vpop.f32.mrf.mxu0
    %v247 = vpop.f32.mrf.mxu0
    %v248 = vadd.f32 %v99, %v247
    %v249 = vpop.f32.mrf.mxu0
    %250 = vmatprep.mubr.bf16.mxu0 0
    %251 = vmatmul.mubr.bf16.gmra.mxu0 %v151
    %v252 = vpop.f32.mrf.mxu0
    %v253 = vadd.f32 %v99, %v252
    %v254 = vpop.f32.mrf.mxu0
    %v255 = vpop.f32.mrf.mxu0
    %v256 = vadd.f32 %v99, %v255
    %v257 = vpop.f32.mrf.mxu0
    %258 = vmatprep.mubr.bf16.mxu0 0
    %259 = vmatmul.mubr.bf16.gmra.mxu0 %v154
    %v260 = vpop.f32.mrf.mxu0
    %v261 = vadd.f32 %v99, %v260
    %v262 = vpop.f32.mrf.mxu0
    %v263 = vpop.f32.mrf.mxu0
    %v264 = vadd.f32 %v99, %v263
    %v265 = vpop.f32.mrf.mxu0
    %266 = vmatprep.mubr.bf16.mxu0 0
    %267 = vmatmul.mubr.bf16.gmra.mxu0 %v157
    %v268 = vpop.f32.mrf.mxu0
    %v269 = vadd.f32 %v99, %v268
    %v270 = vpop.f32.mrf.mxu0
    %v271 = vpop.f32.mrf.mxu0
    %v272 = vadd.f32 %v99, %v271
    %v273 = vpop.f32.mrf.mxu0
    %274 = vmatprep.mubr.bf16.mxu0 0
    %275 = vmatmul.mubr.bf16.gmra.mxu0 %v160
    %v276 = vpop.f32.mrf.mxu0
    %v277 = vadd.f32 %v99, %v276
    %v278 = vpop.f32.mrf.mxu0
    %v279 = vpop.f32.mrf.mxu0
    %v280 = vadd.f32 %v99, %v279
    %v281 = vpop.f32.mrf.mxu0
    %282 = vmatprep.mubr.bf16.mxu0 0
    %283 = vmatmul.mubr.bf16.gmra.mxu0 %v163
    %v284 = vpop.f32.mrf.mxu0
    %v285 = vadd.f32 %v99, %v284
    %v286 = vpop.f32.mrf.mxu0
    %v287 = vpop.f32.mrf.mxu0
    %v288 = vadd.f32 %v99, %v287
    %v289 = vpop.f32.mrf.mxu0
    %290 = vmatprep.mubr.bf16.mxu0 0
    %291 = vmatmul.mubr.bf16.gmra.mxu0 %v166
    %v292 = vpop.f32.mrf.mxu0
    %v293 = vadd.f32 %v99, %v292
    %v294 = vpop.f32.mrf.mxu0
    %v295 = vpop.f32.mrf.mxu0
    %v296 = vadd.f32 %v99, %v295
    %v297 = vpop.f32.mrf.mxu0
    %298 = vmatprep.mubr.bf16.mxu0 0
    %299 = vmatmul.mubr.bf16.gmra.mxu0 %v169
    %v300 = vpop.f32.mrf.mxu0
    %v301 = vadd.f32 %v99, %v300
    %v302 = vpop.f32.mrf.mxu0
    %v303 = vpop.f32.mrf.mxu0
    %v304 = vadd.f32 %v99, %v303
    %v305 = vpop.f32.mrf.mxu0
    %306 = vmatprep.mubr.bf16.mxu0 0
    %307 = vmatmul.mubr.bf16.gmra.mxu0 %v172
    %v308 = vpop.f32.mrf.mxu0
    %v309 = vadd.f32 %v99, %v308
    %v310 = vpop.f32.mrf.mxu0
    %v311 = vpop.f32.mrf.mxu0
    %v312 = vadd.f32 %v99, %v311
    %v313 = vpop.f32.mrf.mxu0
    %314 = vmatprep.mubr.bf16.mxu0 0
    %315 = vmatmul.mubr.bf16.gmra.mxu0 %v175
    %v316 = vpop.f32.mrf.mxu0
    %v317 = vadd.f32 %v99, %v316
    %v318 = vpop.f32.mrf.mxu0
    %v319 = vpop.f32.mrf.mxu0
    %v320 = vadd.f32 %v99, %v319
    %v321 = vpop.f32.mrf.mxu0
    %322 = vmatprep.mubr.bf16.mxu0 0
    %323 = vmatmul.mubr.bf16.gmra.mxu0 %v178
    %v324 = vpop.f32.mrf.mxu0
    %v325 = vadd.f32 %v99, %v324
    %v326 = vpop.f32.mrf.mxu0
    %v327 = vpop.f32.mrf.mxu0
    %v328 = vadd.f32 %v99, %v327
    %v329 = vpop.f32.mrf.mxu0
    %330 = vmatprep.mubr.bf16.mxu0 0
    %331 = vmatmul.mubr.bf16.gmra.mxu0 %v181
    %v332 = vpop.f32.mrf.mxu0
    %v333 = vadd.f32 %v99, %v332
    %v334 = vpop.f32.mrf.mxu0
    %v335 = vpop.f32.mrf.mxu0
    %v336 = vadd.f32 %v99, %v335
    %v337 = vpop.f32.mrf.mxu0
    %338 = vmatprep.mubr.bf16.mxu0 0
    %339 = vmatmul.mubr.bf16.gmra.mxu0 %v184
    %v340 = vpop.f32.mrf.mxu0
    %v341 = vadd.f32 %v99, %v340
    %v342 = vpop.f32.mrf.mxu0
    %v343 = vpop.f32.mrf.mxu0
    %v344 = vadd.f32 %v99, %v343
    %v345 = vpop.f32.mrf.mxu0
    %346 = vdwg.mxu0
    %v347 = vmax.f32 %v221, 0.0
    %v348 = vmax.f32 %v224, 0.0
    %v349 = vmax.f32 %v229, 0.0
    %v350 = vmax.f32 %v232, 0.0
    %v351 = vmax.f32 %v237, 0.0
    %v352 = vmax.f32 %v240, 0.0
    %v353 = vmax.f32 %v245, 0.0
    %v354 = vmax.f32 %v248, 0.0
    %v355 = vmax.f32 %v253, 0.0
    %v356 = vmax.f32 %v256, 0.0
    %v357 = vmax.f32 %v261, 0.0
    %v358 = vmax.f32 %v264, 0.0
    %v359 = vmax.f32 %v269, 0.0
    %v360 = vmax.f32 %v272, 0.0
    %v361 = vmax.f32 %v277, 0.0
    %v362 = vmax.f32 %v280, 0.0
    %v363 = vmax.f32 %v285, 0.0
    %v364 = vmax.f32 %v288, 0.0
    %v365 = vmax.f32 %v293, 0.0
    %v366 = vmax.f32 %v296, 0.0
    %v367 = vmax.f32 %v301, 0.0
    %v368 = vmax.f32 %v304, 0.0
    %v369 = vmax.f32 %v309, 0.0
    %v370 = vmax.f32 %v312, 0.0
    %v371 = vmax.f32 %v317, 0.0
    %v372 = vmax.f32 %v320, 0.0
    %v373 = vmax.f32 %v325, 0.0
    %v374 = vmax.f32 %v328, 0.0
    %v375 = vmax.f32 %v333, 0.0
    %v376 = vmax.f32 %v336, 0.0
    %v377 = vmax.f32 %v341, 0.0
    %v378 = vmax.f32 %v344, 0.0
    %v379 = vpack.c.bf16 %v348, %v347
    %v380 = vpack.c.bf16 %v350, %v349
    %v381 = vpack.c.bf16 %v352, %v351
    %v382 = vpack.c.bf16 %v354, %v353
    %v383 = vpack.c.bf16 %v356, %v355
    %v384 = vpack.c.bf16 %v358, %v357
    %v385 = vpack.c.bf16 %v360, %v359
    %v386 = vpack.c.bf16 %v362, %v361
    %v387 = vpack.c.bf16 %v364, %v363
    %v388 = vpack.c.bf16 %v366, %v365
    %v389 = vpack.c.bf16 %v368, %v367
    %v390 = vpack.c.bf16 %v370, %v369
    %v391 = vpack.c.bf16 %v372, %v371
    %v392 = vpack.c.bf16 %v374, %v373
    %v393 = vpack.c.bf16 %v376, %v375
    %v394 = vpack.c.bf16 %v378, %v377
    %v395 = vld [vmem:[%s3] sm:$0xf]
    %v396 = vld [vmem:[%s3 + $0x4] sm:$0xf]
    %v397 = vld [vmem:[%s3 + $0x8] sm:$0xf]
    %v398 = vld [vmem:[%s3 + $0xc] sm:$0xf]
    %v399 = vld [vmem:[%s3 + $0x10] sm:$0xf]
    %v400 = vld [vmem:[%s3 + $0x14] sm:$0xf]
    %v401 = vld [vmem:[%s3 + $0x18] sm:$0xf]
    %v402 = vld [vmem:[%s3 + $0x1c] sm:$0xf]
    %v403 = vld [vmem:[%s3 + $0x20] sm:$0xf]
    %v404 = vld [vmem:[%s3 + $0x24] sm:$0xf]
    %v405 = vld [vmem:[%s3 + $0x28] sm:$0xf]
    %v406 = vld [vmem:[%s3 + $0x2c] sm:$0xf]
    %v407 = vld [vmem:[%s3 + $0x30] sm:$0xf]
    %v408 = vld [vmem:[%s3 + $0x34] sm:$0xf]
    %v409 = vld [vmem:[%s3 + $0x38] sm:$0xf]
    %v410 = vld [vmem:[%s3 + $0x3c] sm:$0xf]
    %v411 = vld [vmem:[%s4] sm:$0x1]
    %v413 = vlaneseq
    %v414 = vshrl.u32 %v413, 7
    %v415 = vsub.s32 0, %v414
    %v416 = vrot.slane %v411, %v415
    %v434 = vunpack.c.l.b16 %v395
    %v435 = vunpack.c.l.b16 %v396
    %v436 = vunpack.c.l.b16 %v397
    %v437 = vunpack.c.l.b16 %v398
    %v438 = vunpack.c.l.b16 %v399
    %v439 = vunpack.c.l.b16 %v400
    %v440 = vunpack.c.l.b16 %v401
    %v441 = vunpack.c.l.b16 %v402
    %v442 = vunpack.c.l.b16 %v403
    %v443 = vunpack.c.l.b16 %v404
    %v444 = vunpack.c.l.b16 %v405
    %v445 = vunpack.c.l.b16 %v406
    %v446 = vunpack.c.l.b16 %v407
    %v447 = vunpack.c.l.b16 %v408
    %v448 = vunpack.c.l.b16 %v409
    %v449 = vunpack.c.l.b16 %v410
    %v450 = vpack.c.b16 %v435, %v434
    %v451 = vpack.c.b16 %v437, %v436
    %v452 = vpack.c.b16 %v439, %v438
    %v453 = vpack.c.b16 %v441, %v440
    %v454 = vpack.c.b16 %v443, %v442
    %v455 = vpack.c.b16 %v445, %v444
    %v456 = vpack.c.b16 %v447, %v446
    %v457 = vpack.c.b16 %v449, %v448
    %466 = vmatprep.subr.bf16.mxu0 0
    %467 = vmatpush1.bf16.msra.mxu0 %v457
    %468 = vmatprep.subr.bf16.mxu0 0
    %469 = vmatpush1.bf16.msra.mxu0 %v456
    %470 = vmatprep.subr.bf16.mxu0 0
    %471 = vmatpush1.bf16.msra.mxu0 %v455
    %472 = vmatprep.subr.bf16.mxu0 0
    %473 = vmatpush1.bf16.msra.mxu0 %v454
    %474 = vmatprep.subr.bf16.mxu0 0
    %475 = vmatpush1.bf16.msra.mxu0 %v453
    %476 = vmatprep.subr.bf16.mxu0 0
    %477 = vmatpush1.bf16.msra.mxu0 %v452
    %478 = vmatprep.subr.bf16.mxu0 0
    %479 = vmatpush1.bf16.msra.mxu0 %v451
    %480 = vmatprep.subr.bf16.mxu0 0
    %481 = vmatpush1.bf16.msra.mxu0 %v450
    %482 = vmatprep.subr.bf16.mxu0 0
    %483 = vmatpush2.bf16.msra.mxu0 0
    %484 = vmatprep.subr.bf16.mxu0 0
    %485 = vmatpush2.bf16.msra.mxu0 0
    %486 = vmatprep.subr.bf16.mxu0 0
    %487 = vmatpush2.bf16.msra.mxu0 0
    %488 = vmatprep.subr.bf16.mxu0 0
    %489 = vmatpush2.bf16.msra.mxu0 0
    %490 = vmatprep.subr.bf16.mxu0 0
    %491 = vmatpush2.bf16.msra.mxu0 0
    %492 = vmatprep.subr.bf16.mxu0 0
    %493 = vmatpush2.bf16.msra.mxu0 0
    %494 = vmatprep.subr.bf16.mxu0 0
    %495 = vmatpush2.bf16.msra.mxu0 0
    %496 = vmatprep.subr.bf16.mxu0 0
    %497 = vmatpush2.bf16.msra.mxu0 0
    %498 = vmatprep.mubr.bf16.mxu0 0
    %499 = vmatmul.mubr.bf16.gmra.mxu0 %v379
    %v500 = vpop.f32.mrf.mxu0
    %v501 = vadd.f32 %v416, %v500
    %v502 = vpop.f32.mrf.mxu0
    %v503 = vpop.f32.mrf.mxu0
    %v504 = vadd.f32 %v416, %v503
    %v505 = vpop.f32.mrf.mxu0
    %506 = vmatprep.mubr.bf16.mxu0 0
    %507 = vmatmul.mubr.bf16.gmra.mxu0 %v380
    %v508 = vpop.f32.mrf.mxu0
    %v509 = vadd.f32 %v416, %v508
    %v510 = vpop.f32.mrf.mxu0
    %v511 = vpop.f32.mrf.mxu0
    %v512 = vadd.f32 %v416, %v511
    %v513 = vpop.f32.mrf.mxu0
    %514 = vmatprep.mubr.bf16.mxu0 0
    %515 = vmatmul.mubr.bf16.gmra.mxu0 %v381
    %v516 = vpop.f32.mrf.mxu0
    %v517 = vadd.f32 %v416, %v516
    %v518 = vpop.f32.mrf.mxu0
    %v519 = vpop.f32.mrf.mxu0
    %v520 = vadd.f32 %v416, %v519
    %v521 = vpop.f32.mrf.mxu0
    %522 = vmatprep.mubr.bf16.mxu0 0
    %523 = vmatmul.mubr.bf16.gmra.mxu0 %v382
    %v524 = vpop.f32.mrf.mxu0
    %v525 = vadd.f32 %v416, %v524
    %v526 = vpop.f32.mrf.mxu0
    %v527 = vpop.f32.mrf.mxu0
    %v528 = vadd.f32 %v416, %v527
    %v529 = vpop.f32.mrf.mxu0
    %530 = vmatprep.mubr.bf16.mxu0 0
    %531 = vmatmul.mubr.bf16.gmra.mxu0 %v383
    %v532 = vpop.f32.mrf.mxu0
    %v533 = vadd.f32 %v416, %v532
    %v534 = vpop.f32.mrf.mxu0
    %v535 = vpop.f32.mrf.mxu0
    %v536 = vadd.f32 %v416, %v535
    %v537 = vpop.f32.mrf.mxu0
    %538 = vmatprep.mubr.bf16.mxu0 0
    %539 = vmatmul.mubr.bf16.gmra.mxu0 %v384
    %v540 = vpop.f32.mrf.mxu0
    %v541 = vadd.f32 %v416, %v540
    %v542 = vpop.f32.mrf.mxu0
    %v543 = vpop.f32.mrf.mxu0
    %v544 = vadd.f32 %v416, %v543
    %v545 = vpop.f32.mrf.mxu0
    %546 = vmatprep.mubr.bf16.mxu0 0
    %547 = vmatmul.mubr.bf16.gmra.mxu0 %v385
    %v548 = vpop.f32.mrf.mxu0
    %v549 = vadd.f32 %v416, %v548
    %v550 = vpop.f32.mrf.mxu0
    %v551 = vpop.f32.mrf.mxu0
    %v552 = vadd.f32 %v416, %v551
    %v553 = vpop.f32.mrf.mxu0
    %554 = vmatprep.mubr.bf16.mxu0 0
    %555 = vmatmul.mubr.bf16.gmra.mxu0 %v386
    %v556 = vpop.f32.mrf.mxu0
    %v557 = vadd.f32 %v416, %v556
    %v558 = vpop.f32.mrf.mxu0
    %v559 = vpop.f32.mrf.mxu0
    %v560 = vadd.f32 %v416, %v559
    %v561 = vpop.f32.mrf.mxu0
    %562 = vmatprep.mubr.bf16.mxu0 0
    %563 = vmatmul.mubr.bf16.gmra.mxu0 %v387
    %v564 = vpop.f32.mrf.mxu0
    %v565 = vadd.f32 %v416, %v564
    %v566 = vpop.f32.mrf.mxu0
    %v567 = vpop.f32.mrf.mxu0
    %v568 = vadd.f32 %v416, %v567
    %v569 = vpop.f32.mrf.mxu0
    %570 = vmatprep.mubr.bf16.mxu0 0
    %571 = vmatmul.mubr.bf16.gmra.mxu0 %v388
    %v572 = vpop.f32.mrf.mxu0
    %v573 = vadd.f32 %v416, %v572
    %v574 = vpop.f32.mrf.mxu0
    %v575 = vpop.f32.mrf.mxu0
    %v576 = vadd.f32 %v416, %v575
    %v577 = vpop.f32.mrf.mxu0
    %578 = vmatprep.mubr.bf16.mxu0 0
    %579 = vmatmul.mubr.bf16.gmra.mxu0 %v389
    %v580 = vpop.f32.mrf.mxu0
    %v581 = vadd.f32 %v416, %v580
    %v582 = vpop.f32.mrf.mxu0
    %v583 = vpop.f32.mrf.mxu0
    %v584 = vadd.f32 %v416, %v583
    %v585 = vpop.f32.mrf.mxu0
    %586 = vmatprep.mubr.bf16.mxu0 0
    %587 = vmatmul.mubr.bf16.gmra.mxu0 %v390
    %v588 = vpop.f32.mrf.mxu0
    %v589 = vadd.f32 %v416, %v588
    %v590 = vpop.f32.mrf.mxu0
    %v591 = vpop.f32.mrf.mxu0
    %v592 = vadd.f32 %v416, %v591
    %v593 = vpop.f32.mrf.mxu0
    %594 = vmatprep.mubr.bf16.mxu0 0
    %595 = vmatmul.mubr.bf16.gmra.mxu0 %v391
    %v596 = vpop.f32.mrf.mxu0
    %v597 = vadd.f32 %v416, %v596
    %v598 = vpop.f32.mrf.mxu0
    %v599 = vpop.f32.mrf.mxu0
    %v600 = vadd.f32 %v416, %v599
    %v601 = vpop.f32.mrf.mxu0
    %602 = vmatprep.mubr.bf16.mxu0 0
    %603 = vmatmul.mubr.bf16.gmra.mxu0 %v392
    %v604 = vpop.f32.mrf.mxu0
    %v605 = vadd.f32 %v416, %v604
    %v606 = vpop.f32.mrf.mxu0
    %v607 = vpop.f32.mrf.mxu0
    %v608 = vadd.f32 %v416, %v607
    %v609 = vpop.f32.mrf.mxu0
    %610 = vmatprep.mubr.bf16.mxu0 0
    %611 = vmatmul.mubr.bf16.gmra.mxu0 %v393
    %v612 = vpop.f32.mrf.mxu0
    %v613 = vadd.f32 %v416, %v612
    %v614 = vpop.f32.mrf.mxu0
    %v615 = vpop.f32.mrf.mxu0
    %v616 = vadd.f32 %v416, %v615
    %v617 = vpop.f32.mrf.mxu0
    %618 = vmatprep.mubr.bf16.mxu0 0
    %619 = vmatmul.mubr.bf16.gmra.mxu0 %v394
    %v620 = vpop.f32.mrf.mxu0
    %v621 = vadd.f32 %v416, %v620
    %v622 = vpop.f32.mrf.mxu0
    %v623 = vpop.f32.mrf.mxu0
    %v624 = vadd.f32 %v416, %v623
    %v625 = vpop.f32.mrf.mxu0
    %626 = vdwg.mxu0
    %v627 = vmax.f32 %v501, 0.0
    %v628 = vmax.f32 %v504, 0.0
    %v629 = vmax.f32 %v509, 0.0
    %v630 = vmax.f32 %v512, 0.0
    %v631 = vmax.f32 %v517, 0.0
    %v632 = vmax.f32 %v520, 0.0
    %v633 = vmax.f32 %v525, 0.0
    %v634 = vmax.f32 %v528, 0.0
    %v635 = vmax.f32 %v533, 0.0
    %v636 = vmax.f32 %v536, 0.0
    %v637 = vmax.f32 %v541, 0.0
    %v638 = vmax.f32 %v544, 0.0
    %v639 = vmax.f32 %v549, 0.0
    %v640 = vmax.f32 %v552, 0.0
    %v641 = vmax.f32 %v557, 0.0
    %v642 = vmax.f32 %v560, 0.0
    %v643 = vmax.f32 %v565, 0.0
    %v644 = vmax.f32 %v568, 0.0
    %v645 = vmax.f32 %v573, 0.0
    %v646 = vmax.f32 %v576, 0.0
    %v647 = vmax.f32 %v581, 0.0
    %v648 = vmax.f32 %v584, 0.0
    %v649 = vmax.f32 %v589, 0.0
    %v650 = vmax.f32 %v592, 0.0
    %v651 = vmax.f32 %v597, 0.0
    %v652 = vmax.f32 %v600, 0.0
    %v653 = vmax.f32 %v605, 0.0
    %v654 = vmax.f32 %v608, 0.0
    %v655 = vmax.f32 %v613, 0.0
    %v656 = vmax.f32 %v616, 0.0
    %v657 = vmax.f32 %v621, 0.0
    %v658 = vmax.f32 %v624, 0.0
    %v659 = vpack.c.bf16 %v628, %v627
    %v660 = vpack.c.bf16 %v630, %v629
    %v661 = vpack.c.bf16 %v632, %v631
    %v662 = vpack.c.bf16 %v634, %v633
    %v663 = vpack.c.bf16 %v636, %v635
    %v664 = vpack.c.bf16 %v638, %v637
    %v665 = vpack.c.bf16 %v640, %v639
    %v666 = vpack.c.bf16 %v642, %v641
    %v667 = vpack.c.bf16 %v644, %v643
    %v668 = vpack.c.bf16 %v646, %v645
    %v669 = vpack.c.bf16 %v648, %v647
    %v670 = vpack.c.bf16 %v650, %v649
    %v671 = vpack.c.bf16 %v652, %v651
    %v672 = vpack.c.bf16 %v654, %v653
    %v673 = vpack.c.bf16 %v656, %v655
    %v674 = vpack.c.bf16 %v658, %v657
    %v675 = vld [vmem:[%s5] sm:$0xf]
    %v676 = vld [vmem:[%s5 + $0x4] sm:$0xf]
    %v677 = vld [vmem:[%s5 + $0x8] sm:$0xf]
    %v678 = vld [vmem:[%s5 + $0xc] sm:$0xf]
    %v679 = vld [vmem:[%s5 + $0x10] sm:$0xf]
    %v680 = vld [vmem:[%s5 + $0x14] sm:$0xf]
    %v681 = vld [vmem:[%s5 + $0x18] sm:$0xf]
    %v682 = vld [vmem:[%s5 + $0x1c] sm:$0xf]
    %v683 = vld [vmem:[%s5 + $0x20] sm:$0xf]
    %v684 = vld [vmem:[%s5 + $0x24] sm:$0xf]
    %v685 = vld [vmem:[%s5 + $0x28] sm:$0xf]
    %v686 = vld [vmem:[%s5 + $0x2c] sm:$0xf]
    %v687 = vld [vmem:[%s5 + $0x30] sm:$0xf]
    %v688 = vld [vmem:[%s5 + $0x34] sm:$0xf]
    %v689 = vld [vmem:[%s5 + $0x38] sm:$0xf]
    %v690 = vld [vmem:[%s5 + $0x3c] sm:$0xf]
    %v691 = vld [vmem:[%s6] sm:$0x1]
    %v693 = vlaneseq
    %v694 = vshrl.u32 %v693, 7
    %v695 = vsub.s32 0, %v694
    %v696 = vrot.slane %v691, %v695
    %v714 = vunpack.c.l.b16 %v675
    %v715 = vunpack.c.l.b16 %v676
    %v716 = vunpack.c.l.b16 %v677
    %v717 = vunpack.c.l.b16 %v678
    %v718 = vunpack.c.l.b16 %v679
    %v719 = vunpack.c.l.b16 %v680
    %v720 = vunpack.c.l.b16 %v681
    %v721 = vunpack.c.l.b16 %v682
    %v722 = vunpack.c.l.b16 %v683
    %v723 = vunpack.c.l.b16 %v684
    %v724 = vunpack.c.l.b16 %v685
    %v725 = vunpack.c.l.b16 %v686
    %v726 = vunpack.c.l.b16 %v687
    %v727 = vunpack.c.l.b16 %v688
    %v728 = vunpack.c.l.b16 %v689
    %v729 = vunpack.c.l.b16 %v690
    %v730 = vpack.c.b16 %v715, %v714
    %v731 = vpack.c.b16 %v717, %v716
    %v732 = vpack.c.b16 %v719, %v718
    %v733 = vpack.c.b16 %v721, %v720
    %v734 = vpack.c.b16 %v723, %v722
    %v735 = vpack.c.b16 %v725, %v724
    %v736 = vpack.c.b16 %v727, %v726
    %v737 = vpack.c.b16 %v729, %v728
    %746 = vmatprep.subr.bf16.mxu0 0
    %747 = vmatpush1.bf16.msra.mxu0 %v737
    %748 = vmatprep.subr.bf16.mxu0 0
    %749 = vmatpush1.bf16.msra.mxu0 %v736
    %750 = vmatprep.subr.bf16.mxu0 0
    %751 = vmatpush1.bf16.msra.mxu0 %v735
    %752 = vmatprep.subr.bf16.mxu0 0
    %753 = vmatpush1.bf16.msra.mxu0 %v734
    %754 = vmatprep.subr.bf16.mxu0 0
    %755 = vmatpush1.bf16.msra.mxu0 %v733
    %756 = vmatprep.subr.bf16.mxu0 0
    %757 = vmatpush1.bf16.msra.mxu0 %v732
    %758 = vmatprep.subr.bf16.mxu0 0
    %759 = vmatpush1.bf16.msra.mxu0 %v731
    %760 = vmatprep.subr.bf16.mxu0 0
    %761 = vmatpush1.bf16.msra.mxu0 %v730
    %762 = vmatprep.subr.bf16.mxu0 0
    %763 = vmatpush2.bf16.msra.mxu0 0
    %764 = vmatprep.subr.bf16.mxu0 0
    %765 = vmatpush2.bf16.msra.mxu0 0
    %766 = vmatprep.subr.bf16.mxu0 0
    %767 = vmatpush2.bf16.msra.mxu0 0
    %768 = vmatprep.subr.bf16.mxu0 0
    %769 = vmatpush2.bf16.msra.mxu0 0
    %770 = vmatprep.subr.bf16.mxu0 0
    %771 = vmatpush2.bf16.msra.mxu0 0
    %772 = vmatprep.subr.bf16.mxu0 0
    %773 = vmatpush2.bf16.msra.mxu0 0
    %774 = vmatprep.subr.bf16.mxu0 0
    %775 = vmatpush2.bf16.msra.mxu0 0
    %776 = vmatprep.subr.bf16.mxu0 0
    %777 = vmatpush2.bf16.msra.mxu0 0
    %778 = vmatprep.mubr.bf16.mxu0 0
    %779 = vmatmul.mubr.bf16.gmra.mxu0 %v659
    %v780 = vpop.f32.mrf.mxu0
    %v781 = vadd.f32 %v696, %v780
    %v782 = vpop.f32.mrf.mxu0
    %v783 = vpop.f32.mrf.mxu0
    %v784 = vadd.f32 %v696, %v783
    %v785 = vpop.f32.mrf.mxu0
    %786 = vmatprep.mubr.bf16.mxu0 0
    %787 = vmatmul.mubr.bf16.gmra.mxu0 %v660
    %v788 = vpop.f32.mrf.mxu0
    %v789 = vadd.f32 %v696, %v788
    %v790 = vpop.f32.mrf.mxu0
    %v791 = vpop.f32.mrf.mxu0
    %v792 = vadd.f32 %v696, %v791
    %v793 = vpop.f32.mrf.mxu0
    %794 = vmatprep.mubr.bf16.mxu0 0
    %795 = vmatmul.mubr.bf16.gmra.mxu0 %v661
    %v796 = vpop.f32.mrf.mxu0
    %v797 = vadd.f32 %v696, %v796
    %v798 = vpop.f32.mrf.mxu0
    %v799 = vpop.f32.mrf.mxu0
    %v800 = vadd.f32 %v696, %v799
    %v801 = vpop.f32.mrf.mxu0
    %802 = vmatprep.mubr.bf16.mxu0 0
    %803 = vmatmul.mubr.bf16.gmra.mxu0 %v662
    %v804 = vpop.f32.mrf.mxu0
    %v805 = vadd.f32 %v696, %v804
    %v806 = vpop.f32.mrf.mxu0
    %v807 = vpop.f32.mrf.mxu0
    %v808 = vadd.f32 %v696, %v807
    %v809 = vpop.f32.mrf.mxu0
    %810 = vmatprep.mubr.bf16.mxu0 0
    %811 = vmatmul.mubr.bf16.gmra.mxu0 %v663
    %v812 = vpop.f32.mrf.mxu0
    %v813 = vadd.f32 %v696, %v812
    %v814 = vpop.f32.mrf.mxu0
    %v815 = vpop.f32.mrf.mxu0
    %v816 = vadd.f32 %v696, %v815
    %v817 = vpop.f32.mrf.mxu0
    %818 = vmatprep.mubr.bf16.mxu0 0
    %819 = vmatmul.mubr.bf16.gmra.mxu0 %v664
    %v820 = vpop.f32.mrf.mxu0
    %v821 = vadd.f32 %v696, %v820
    %v822 = vpop.f32.mrf.mxu0
    %v823 = vpop.f32.mrf.mxu0
    %v824 = vadd.f32 %v696, %v823
    %v825 = vpop.f32.mrf.mxu0
    %826 = vmatprep.mubr.bf16.mxu0 0
    %827 = vmatmul.mubr.bf16.gmra.mxu0 %v665
    %v828 = vpop.f32.mrf.mxu0
    %v829 = vadd.f32 %v696, %v828
    %v830 = vpop.f32.mrf.mxu0
    %v831 = vpop.f32.mrf.mxu0
    %v832 = vadd.f32 %v696, %v831
    %v833 = vpop.f32.mrf.mxu0
    %834 = vmatprep.mubr.bf16.mxu0 0
    %835 = vmatmul.mubr.bf16.gmra.mxu0 %v666
    %v836 = vpop.f32.mrf.mxu0
    %v837 = vadd.f32 %v696, %v836
    %v838 = vpop.f32.mrf.mxu0
    %v839 = vpop.f32.mrf.mxu0
    %v840 = vadd.f32 %v696, %v839
    %v841 = vpop.f32.mrf.mxu0
    %842 = vmatprep.mubr.bf16.mxu0 0
    %843 = vmatmul.mubr.bf16.gmra.mxu0 %v667
    %v844 = vpop.f32.mrf.mxu0
    %v845 = vadd.f32 %v696, %v844
    %v846 = vpop.f32.mrf.mxu0
    %v847 = vpop.f32.mrf.mxu0
    %v848 = vadd.f32 %v696, %v847
    %v849 = vpop.f32.mrf.mxu0
    %850 = vmatprep.mubr.bf16.mxu0 0
    %851 = vmatmul.mubr.bf16.gmra.mxu0 %v668
    %v852 = vpop.f32.mrf.mxu0
    %v853 = vadd.f32 %v696, %v852
    %v854 = vpop.f32.mrf.mxu0
    %v855 = vpop.f32.mrf.mxu0
    %v856 = vadd.f32 %v696, %v855
    %v857 = vpop.f32.mrf.mxu0
    %858 = vmatprep.mubr.bf16.mxu0 0
    %859 = vmatmul.mubr.bf16.gmra.mxu0 %v669
    %v860 = vpop.f32.mrf.mxu0
    %v861 = vadd.f32 %v696, %v860
    %v862 = vpop.f32.mrf.mxu0
    %v863 = vpop.f32.mrf.mxu0
    %v864 = vadd.f32 %v696, %v863
    %v865 = vpop.f32.mrf.mxu0
    %866 = vmatprep.mubr.bf16.mxu0 0
    %867 = vmatmul.mubr.bf16.gmra.mxu0 %v670
    %v868 = vpop.f32.mrf.mxu0
    %v869 = vadd.f32 %v696, %v868
    %v870 = vpop.f32.mrf.mxu0
    %v871 = vpop.f32.mrf.mxu0
    %v872 = vadd.f32 %v696, %v871
    %v873 = vpop.f32.mrf.mxu0
    %874 = vmatprep.mubr.bf16.mxu0 0
    %875 = vmatmul.mubr.bf16.gmra.mxu0 %v671
    %v876 = vpop.f32.mrf.mxu0
    %v877 = vadd.f32 %v696, %v876
    %v878 = vpop.f32.mrf.mxu0
    %v879 = vpop.f32.mrf.mxu0
    %v880 = vadd.f32 %v696, %v879
    %v881 = vpop.f32.mrf.mxu0
    %882 = vmatprep.mubr.bf16.mxu0 0
    %883 = vmatmul.mubr.bf16.gmra.mxu0 %v672
    %v884 = vpop.f32.mrf.mxu0
    %v885 = vadd.f32 %v696, %v884
    %v886 = vpop.f32.mrf.mxu0
    %v887 = vpop.f32.mrf.mxu0
    %v888 = vadd.f32 %v696, %v887
    %v889 = vpop.f32.mrf.mxu0
    %890 = vmatprep.mubr.bf16.mxu0 0
    %891 = vmatmul.mubr.bf16.gmra.mxu0 %v673
    %v892 = vpop.f32.mrf.mxu0
    %v893 = vadd.f32 %v696, %v892
    %v894 = vpop.f32.mrf.mxu0
    %v895 = vpop.f32.mrf.mxu0
    %v896 = vadd.f32 %v696, %v895
    %v897 = vpop.f32.mrf.mxu0
    %898 = vmatprep.mubr.bf16.mxu0 0
    %899 = vmatmul.mubr.bf16.gmra.mxu0 %v674
    %v900 = vpop.f32.mrf.mxu0
    %v901 = vadd.f32 %v696, %v900
    %v902 = vpop.f32.mrf.mxu0
    %v903 = vpop.f32.mrf.mxu0
    %v904 = vadd.f32 %v696, %v903
    %v905 = vpop.f32.mrf.mxu0
    %906 = vdwg.mxu0
    %v907 = vmax.f32 %v781, 0.0
    %v908 = vmax.f32 %v784, 0.0
    %v909 = vmax.f32 %v789, 0.0
    %v910 = vmax.f32 %v792, 0.0
    %v911 = vmax.f32 %v797, 0.0
    %v912 = vmax.f32 %v800, 0.0
    %v913 = vmax.f32 %v805, 0.0
    %v914 = vmax.f32 %v808, 0.0
    %v915 = vmax.f32 %v813, 0.0
    %v916 = vmax.f32 %v816, 0.0
    %v917 = vmax.f32 %v821, 0.0
    %v918 = vmax.f32 %v824, 0.0
    %v919 = vmax.f32 %v829, 0.0
    %v920 = vmax.f32 %v832, 0.0
    %v921 = vmax.f32 %v837, 0.0
    %v922 = vmax.f32 %v840, 0.0
    %v923 = vmax.f32 %v845, 0.0
    %v924 = vmax.f32 %v848, 0.0
    %v925 = vmax.f32 %v853, 0.0
    %v926 = vmax.f32 %v856, 0.0
    %v927 = vmax.f32 %v861, 0.0
    %v928 = vmax.f32 %v864, 0.0
    %v929 = vmax.f32 %v869, 0.0
    %v930 = vmax.f32 %v872, 0.0
    %v931 = vmax.f32 %v877, 0.0
    %v932 = vmax.f32 %v880, 0.0
    %v933 = vmax.f32 %v885, 0.0
    %v934 = vmax.f32 %v888, 0.0
    %v935 = vmax.f32 %v893, 0.0
    %v936 = vmax.f32 %v896, 0.0
    %v937 = vmax.f32 %v901, 0.0
    %v938 = vmax.f32 %v904, 0.0
    %v939 = vpack.c.bf16 %v908, %v907
    %v940 = vpack.c.bf16 %v910, %v909
    %v941 = vpack.c.bf16 %v912, %v911
    %v942 = vpack.c.bf16 %v914, %v913
    %v943 = vpack.c.bf16 %v916, %v915
    %v944 = vpack.c.bf16 %v918, %v917
    %v945 = vpack.c.bf16 %v920, %v919
    %v946 = vpack.c.bf16 %v922, %v921
    %v947 = vpack.c.bf16 %v924, %v923
    %v948 = vpack.c.bf16 %v926, %v925
    %v949 = vpack.c.bf16 %v928, %v927
    %v950 = vpack.c.bf16 %v930, %v929
    %v951 = vpack.c.bf16 %v932, %v931
    %v952 = vpack.c.bf16 %v934, %v933
    %v953 = vpack.c.bf16 %v936, %v935
    %v954 = vpack.c.bf16 %v938, %v937
    %v955 = vld [vmem:[%s7] sm:$0xf]
    %v956 = vld [vmem:[%s7 + $0x4] sm:$0xf]
    %v957 = vld [vmem:[%s7 + $0x8] sm:$0xf]
    %v958 = vld [vmem:[%s7 + $0xc] sm:$0xf]
    %v959 = vld [vmem:[%s7 + $0x10] sm:$0xf]
    %v960 = vld [vmem:[%s7 + $0x14] sm:$0xf]
    %v961 = vld [vmem:[%s7 + $0x18] sm:$0xf]
    %v962 = vld [vmem:[%s7 + $0x1c] sm:$0xf]
    %v963 = vld [vmem:[%s7 + $0x20] sm:$0xf]
    %v964 = vld [vmem:[%s7 + $0x24] sm:$0xf]
    %v965 = vld [vmem:[%s7 + $0x28] sm:$0xf]
    %v966 = vld [vmem:[%s7 + $0x2c] sm:$0xf]
    %v967 = vld [vmem:[%s7 + $0x30] sm:$0xf]
    %v968 = vld [vmem:[%s7 + $0x34] sm:$0xf]
    %v969 = vld [vmem:[%s7 + $0x38] sm:$0xf]
    %v970 = vld [vmem:[%s7 + $0x3c] sm:$0xf]
    %v971 = vld [vmem:[%s8] sm:$0x1]
    %v973 = vlaneseq
    %v974 = vshrl.u32 %v973, 7
    %v975 = vsub.s32 0, %v974
    %v976 = vrot.slane %v971, %v975
    %v994 = vunpack.c.l.b16 %v955
    %v995 = vunpack.c.l.b16 %v956
    %v996 = vunpack.c.l.b16 %v957
    %v997 = vunpack.c.l.b16 %v958
    %v998 = vunpack.c.l.b16 %v959
    %v999 = vunpack.c.l.b16 %v960
    %v1000 = vunpack.c.l.b16 %v961
    %v1001 = vunpack.c.l.b16 %v962
    %v1002 = vunpack.c.l.b16 %v963
    %v1003 = vunpack.c.l.b16 %v964
    %v1004 = vunpack.c.l.b16 %v965
    %v1005 = vunpack.c.l.b16 %v966
    %v1006 = vunpack.c.l.b16 %v967
    %v1007 = vunpack.c.l.b16 %v968
    %v1008 = vunpack.c.l.b16 %v969
    %v1009 = vunpack.c.l.b16 %v970
    %v1010 = vpack.c.b16 %v995, %v994
    %v1011 = vpack.c.b16 %v997, %v996
    %v1012 = vpack.c.b16 %v999, %v998
    %v1013 = vpack.c.b16 %v1001, %v1000
    %v1014 = vpack.c.b16 %v1003, %v1002
    %v1015 = vpack.c.b16 %v1005, %v1004
    %v1016 = vpack.c.b16 %v1007, %v1006
    %v1017 = vpack.c.b16 %v1009, %v1008
    %1026 = vmatprep.subr.bf16.mxu0 0
    %1027 = vmatpush1.bf16.msra.mxu0 %v1017
    %1028 = vmatprep.subr.bf16.mxu0 0
    %1029 = vmatpush1.bf16.msra.mxu0 %v1016
    %1030 = vmatprep.subr.bf16.mxu0 0
    %1031 = vmatpush1.bf16.msra.mxu0 %v1015
    %1032 = vmatprep.subr.bf16.mxu0 0
    %1033 = vmatpush1.bf16.msra.mxu0 %v1014
    %1034 = vmatprep.subr.bf16.mxu0 0
    %1035 = vmatpush1.bf16.msra.mxu0 %v1013
    %1036 = vmatprep.subr.bf16.mxu0 0
    %1037 = vmatpush1.bf16.msra.mxu0 %v1012
    %1038 = vmatprep.subr.bf16.mxu0 0
    %1039 = vmatpush1.bf16.msra.mxu0 %v1011
    %1040 = vmatprep.subr.bf16.mxu0 0
    %1041 = vmatpush1.bf16.msra.mxu0 %v1010
    %1042 = vmatprep.subr.bf16.mxu0 0
    %1043 = vmatpush2.bf16.msra.mxu0 0
    %1044 = vmatprep.subr.bf16.mxu0 0
    %1045 = vmatpush2.bf16.msra.mxu0 0
    %1046 = vmatprep.subr.bf16.mxu0 0
    %1047 = vmatpush2.bf16.msra.mxu0 0
    %1048 = vmatprep.subr.bf16.mxu0 0
    %1049 = vmatpush2.bf16.msra.mxu0 0
    %1050 = vmatprep.subr.bf16.mxu0 0
    %1051 = vmatpush2.bf16.msra.mxu0 0
    %1052 = vmatprep.subr.bf16.mxu0 0
    %1053 = vmatpush2.bf16.msra.mxu0 0
    %1054 = vmatprep.subr.bf16.mxu0 0
    %1055 = vmatpush2.bf16.msra.mxu0 0
    %1056 = vmatprep.subr.bf16.mxu0 0
    %1057 = vmatpush2.bf16.msra.mxu0 0
    %1058 = vmatprep.mubr.bf16.mxu0 0
    %1059 = vmatmul.mubr.bf16.gmra.mxu0 %v939
    %v1060 = vpop.f32.mrf.mxu0
    %v1061 = vadd.f32 %v976, %v1060
    %v1062 = vpop.f32.mrf.mxu0
    %v1063 = vpop.f32.mrf.mxu0
    %v1064 = vadd.f32 %v976, %v1063
    %v1065 = vpop.f32.mrf.mxu0
    %1066 = vmatprep.mubr.bf16.mxu0 0
    %1067 = vmatmul.mubr.bf16.gmra.mxu0 %v940
    %v1068 = vpop.f32.mrf.mxu0
    %v1069 = vadd.f32 %v976, %v1068
    %v1070 = vpop.f32.mrf.mxu0
    %v1071 = vpop.f32.mrf.mxu0
    %v1072 = vadd.f32 %v976, %v1071
    %v1073 = vpop.f32.mrf.mxu0
    %1074 = vmatprep.mubr.bf16.mxu0 0
    %1075 = vmatmul.mubr.bf16.gmra.mxu0 %v941
    %v1076 = vpop.f32.mrf.mxu0
    %v1077 = vadd.f32 %v976, %v1076
    %v1078 = vpop.f32.mrf.mxu0
    %v1079 = vpop.f32.mrf.mxu0
    %v1080 = vadd.f32 %v976, %v1079
    %v1081 = vpop.f32.mrf.mxu0
    %1082 = vmatprep.mubr.bf16.mxu0 0
    %1083 = vmatmul.mubr.bf16.gmra.mxu0 %v942
    %v1084 = vpop.f32.mrf.mxu0
    %v1085 = vadd.f32 %v976, %v1084
    %v1086 = vpop.f32.mrf.mxu0
    %v1087 = vpop.f32.mrf.mxu0
    %v1088 = vadd.f32 %v976, %v1087
    %v1089 = vpop.f32.mrf.mxu0
    %1090 = vmatprep.mubr.bf16.mxu0 0
    %1091 = vmatmul.mubr.bf16.gmra.mxu0 %v943
    %v1092 = vpop.f32.mrf.mxu0
    %v1093 = vadd.f32 %v976, %v1092
    %v1094 = vpop.f32.mrf.mxu0
    %v1095 = vpop.f32.mrf.mxu0
    %v1096 = vadd.f32 %v976, %v1095
    %v1097 = vpop.f32.mrf.mxu0
    %1098 = vmatprep.mubr.bf16.mxu0 0
    %1099 = vmatmul.mubr.bf16.gmra.mxu0 %v944
    %v1100 = vpop.f32.mrf.mxu0
    %v1101 = vadd.f32 %v976, %v1100
    %v1102 = vpop.f32.mrf.mxu0
    %v1103 = vpop.f32.mrf.mxu0
    %v1104 = vadd.f32 %v976, %v1103
    %v1105 = vpop.f32.mrf.mxu0
    %1106 = vmatprep.mubr.bf16.mxu0 0
    %1107 = vmatmul.mubr.bf16.gmra.mxu0 %v945
    %v1108 = vpop.f32.mrf.mxu0
    %v1109 = vadd.f32 %v976, %v1108
    %v1110 = vpop.f32.mrf.mxu0
    %v1111 = vpop.f32.mrf.mxu0
    %v1112 = vadd.f32 %v976, %v1111
    %v1113 = vpop.f32.mrf.mxu0
    %1114 = vmatprep.mubr.bf16.mxu0 0
    %1115 = vmatmul.mubr.bf16.gmra.mxu0 %v946
    %v1116 = vpop.f32.mrf.mxu0
    %v1117 = vadd.f32 %v976, %v1116
    %v1118 = vpop.f32.mrf.mxu0
    %v1119 = vpop.f32.mrf.mxu0
    %v1120 = vadd.f32 %v976, %v1119
    %v1121 = vpop.f32.mrf.mxu0
    %1122 = vmatprep.mubr.bf16.mxu0 0
    %1123 = vmatmul.mubr.bf16.gmra.mxu0 %v947
    %v1124 = vpop.f32.mrf.mxu0
    %v1125 = vadd.f32 %v976, %v1124
    %v1126 = vpop.f32.mrf.mxu0
    %v1127 = vpop.f32.mrf.mxu0
    %v1128 = vadd.f32 %v976, %v1127
    %v1129 = vpop.f32.mrf.mxu0
    %1130 = vmatprep.mubr.bf16.mxu0 0
    %1131 = vmatmul.mubr.bf16.gmra.mxu0 %v948
    %v1132 = vpop.f32.mrf.mxu0
    %v1133 = vadd.f32 %v976, %v1132
    %v1134 = vpop.f32.mrf.mxu0
    %v1135 = vpop.f32.mrf.mxu0
    %v1136 = vadd.f32 %v976, %v1135
    %v1137 = vpop.f32.mrf.mxu0
    %1138 = vmatprep.mubr.bf16.mxu0 0
    %1139 = vmatmul.mubr.bf16.gmra.mxu0 %v949
    %v1140 = vpop.f32.mrf.mxu0
    %v1141 = vadd.f32 %v976, %v1140
    %v1142 = vpop.f32.mrf.mxu0
    %v1143 = vpop.f32.mrf.mxu0
    %v1144 = vadd.f32 %v976, %v1143
    %v1145 = vpop.f32.mrf.mxu0
    %1146 = vmatprep.mubr.bf16.mxu0 0
    %1147 = vmatmul.mubr.bf16.gmra.mxu0 %v950
    %v1148 = vpop.f32.mrf.mxu0
    %v1149 = vadd.f32 %v976, %v1148
    %v1150 = vpop.f32.mrf.mxu0
    %v1151 = vpop.f32.mrf.mxu0
    %v1152 = vadd.f32 %v976, %v1151
    %v1153 = vpop.f32.mrf.mxu0
    %1154 = vmatprep.mubr.bf16.mxu0 0
    %1155 = vmatmul.mubr.bf16.gmra.mxu0 %v951
    %v1156 = vpop.f32.mrf.mxu0
    %v1157 = vadd.f32 %v976, %v1156
    %v1158 = vpop.f32.mrf.mxu0
    %v1159 = vpop.f32.mrf.mxu0
    %v1160 = vadd.f32 %v976, %v1159
    %v1161 = vpop.f32.mrf.mxu0
    %1162 = vmatprep.mubr.bf16.mxu0 0
    %1163 = vmatmul.mubr.bf16.gmra.mxu0 %v952
    %v1164 = vpop.f32.mrf.mxu0
    %v1165 = vadd.f32 %v976, %v1164
    %v1166 = vpop.f32.mrf.mxu0
    %v1167 = vpop.f32.mrf.mxu0
    %v1168 = vadd.f32 %v976, %v1167
    %v1169 = vpop.f32.mrf.mxu0
    %1170 = vmatprep.mubr.bf16.mxu0 0
    %1171 = vmatmul.mubr.bf16.gmra.mxu0 %v953
    %v1172 = vpop.f32.mrf.mxu0
    %v1173 = vadd.f32 %v976, %v1172
    %v1174 = vpop.f32.mrf.mxu0
    %v1175 = vpop.f32.mrf.mxu0
    %v1176 = vadd.f32 %v976, %v1175
    %v1177 = vpop.f32.mrf.mxu0
    %1178 = vmatprep.mubr.bf16.mxu0 0
    %1179 = vmatmul.mubr.bf16.gmra.mxu0 %v954
    %v1180 = vpop.f32.mrf.mxu0
    %v1181 = vadd.f32 %v976, %v1180
    %v1182 = vpop.f32.mrf.mxu0
    %v1183 = vpop.f32.mrf.mxu0
    %v1184 = vadd.f32 %v976, %v1183
    %v1185 = vpop.f32.mrf.mxu0
    %1186 = vdwg.mxu0
    %v1187 = vpack.c.bf16 %v1064, %v1061
    %v1188 = vpack.c.bf16 %v1072, %v1069
    %v1189 = vpack.c.bf16 %v1080, %v1077
    %v1190 = vpack.c.bf16 %v1088, %v1085
    %v1191 = vpack.c.bf16 %v1096, %v1093
    %v1192 = vpack.c.bf16 %v1104, %v1101
    %v1193 = vpack.c.bf16 %v1112, %v1109
    %v1194 = vpack.c.bf16 %v1120, %v1117
    %v1195 = vpack.c.bf16 %v1128, %v1125
    %v1196 = vpack.c.bf16 %v1136, %v1133
    %v1197 = vpack.c.bf16 %v1144, %v1141
    %v1198 = vpack.c.bf16 %v1152, %v1149
    %v1199 = vpack.c.bf16 %v1160, %v1157
    %v1200 = vpack.c.bf16 %v1168, %v1165
    %v1201 = vpack.c.bf16 %v1176, %v1173
    %v1202 = vpack.c.bf16 %v1184, %v1181
    %v1219 = vunpack.c.l.b16 %v1187
    %v1220 = vunpack.c.h.b16 %v1187
    %v1221 = vunpack.c.l.b16 %v1188
    %v1222 = vunpack.c.h.b16 %v1188
    %v1223 = vunpack.c.l.b16 %v1189
    %v1224 = vunpack.c.h.b16 %v1189
    %v1225 = vunpack.c.l.b16 %v1190
    %v1226 = vunpack.c.h.b16 %v1190
    %v1227 = vunpack.c.l.b16 %v1191
    %v1228 = vunpack.c.h.b16 %v1191
    %v1229 = vunpack.c.l.b16 %v1192
    %v1230 = vunpack.c.h.b16 %v1192
    %v1231 = vunpack.c.l.b16 %v1193
    %v1232 = vunpack.c.h.b16 %v1193
    %v1233 = vunpack.c.l.b16 %v1194
    %v1234 = vunpack.c.h.b16 %v1194
    %v1235 = vunpack.c.l.b16 %v1195
    %v1236 = vunpack.c.h.b16 %v1195
    %v1237 = vunpack.c.l.b16 %v1196
    %v1238 = vunpack.c.h.b16 %v1196
    %v1239 = vunpack.c.l.b16 %v1197
    %v1240 = vunpack.c.h.b16 %v1197
    %v1241 = vunpack.c.l.b16 %v1198
    %v1242 = vunpack.c.h.b16 %v1198
    %v1243 = vunpack.c.l.b16 %v1199
    %v1244 = vunpack.c.h.b16 %v1199
    %v1245 = vunpack.c.l.b16 %v1200
    %v1246 = vunpack.c.h.b16 %v1200
    %v1247 = vunpack.c.l.b16 %v1201
    %v1248 = vunpack.c.h.b16 %v1201
    %v1249 = vunpack.c.l.b16 %v1202
    %v1250 = vunpack.c.h.b16 %v1202
    %v1251 = vpack.c.b16 %v1219, %v1219
    %v1252 = vpack.c.b16 %v1220, %v1220
    %v1253 = vpack.c.b16 %v1221, %v1221
    %v1254 = vpack.c.b16 %v1222, %v1222
    %v1255 = vpack.c.b16 %v1223, %v1223
    %v1256 = vpack.c.b16 %v1224, %v1224
    %v1257 = vpack.c.b16 %v1225, %v1225
    %v1258 = vpack.c.b16 %v1226, %v1226
    %v1259 = vpack.c.b16 %v1227, %v1227
    %v1260 = vpack.c.b16 %v1228, %v1228
    %v1261 = vpack.c.b16 %v1229, %v1229
    %v1262 = vpack.c.b16 %v1230, %v1230
    %v1263 = vpack.c.b16 %v1231, %v1231
    %v1264 = vpack.c.b16 %v1232, %v1232
    %v1265 = vpack.c.b16 %v1233, %v1233
    %v1266 = vpack.c.b16 %v1234, %v1234
    %v1267 = vpack.c.b16 %v1235, %v1235
    %v1268 = vpack.c.b16 %v1236, %v1236
    %v1269 = vpack.c.b16 %v1237, %v1237
    %v1270 = vpack.c.b16 %v1238, %v1238
    %v1271 = vpack.c.b16 %v1239, %v1239
    %v1272 = vpack.c.b16 %v1240, %v1240
    %v1273 = vpack.c.b16 %v1241, %v1241
    %v1274 = vpack.c.b16 %v1242, %v1242
    %v1275 = vpack.c.b16 %v1243, %v1243
    %v1276 = vpack.c.b16 %v1244, %v1244
    %v1277 = vpack.c.b16 %v1245, %v1245
    %v1278 = vpack.c.b16 %v1246, %v1246
    %v1279 = vpack.c.b16 %v1247, %v1247
    %v1280 = vpack.c.b16 %v1248, %v1248
    %v1281 = vpack.c.b16 %v1249, %v1249
    %v1282 = vpack.c.b16 %v1250, %v1250
    %1315 = vst [vmem:[#allocation2] sm:$0xf] %v1251
    %1316 = vst [vmem:[#allocation2 + $0x4] sm:$0xf] %v1252
    %1317 = vst [vmem:[#allocation2 + $0x8] sm:$0xf] %v1253
    %1318 = vst [vmem:[#allocation2 + $0xc] sm:$0xf] %v1254
    %1319 = vst [vmem:[#allocation2 + $0x10] sm:$0xf] %v1255
    %1320 = vst [vmem:[#allocation2 + $0x14] sm:$0xf] %v1256
    %1321 = vst [vmem:[#allocation2 + $0x18] sm:$0xf] %v1257
    %1322 = vst [vmem:[#allocation2 + $0x1c] sm:$0xf] %v1258
    %1323 = vst [vmem:[#allocation2 + $0x20] sm:$0xf] %v1259
    %1324 = vst [vmem:[#allocation2 + $0x24] sm:$0xf] %v1260
    %1325 = vst [vmem:[#allocation2 + $0x28] sm:$0xf] %v1261
    %1326 = vst [vmem:[#allocation2 + $0x2c] sm:$0xf] %v1262
    %1327 = vst [vmem:[#allocation2 + $0x30] sm:$0xf] %v1263
    %1328 = vst [vmem:[#allocation2 + $0x34] sm:$0xf] %v1264
    %1329 = vst [vmem:[#allocation2 + $0x38] sm:$0xf] %v1265
    %1330 = vst [vmem:[#allocation2 + $0x3c] sm:$0xf] %v1266
    %1331 = vst [vmem:[#allocation2 + $0x40] sm:$0xf] %v1267
    %1332 = vst [vmem:[#allocation2 + $0x44] sm:$0xf] %v1268
    %1333 = vst [vmem:[#allocation2 + $0x48] sm:$0xf] %v1269
    %1334 = vst [vmem:[#allocation2 + $0x4c] sm:$0xf] %v1270
    %1335 = vst [vmem:[#allocation2 + $0x50] sm:$0xf] %v1271
    %1336 = vst [vmem:[#allocation2 + $0x54] sm:$0xf] %v1272
    %1337 = vst [vmem:[#allocation2 + $0x58] sm:$0xf] %v1273
    %1338 = vst [vmem:[#allocation2 + $0x5c] sm:$0xf] %v1274
    %1339 = vst [vmem:[#allocation2 + $0x60] sm:$0xf] %v1275
    %1340 = vst [vmem:[#allocation2 + $0x64] sm:$0xf] %v1276
    %1341 = vst [vmem:[#allocation2 + $0x68] sm:$0xf] %v1277
    %1342 = vst [vmem:[#allocation2 + $0x6c] sm:$0xf] %v1278
    %1343 = vst [vmem:[#allocation2 + $0x70] sm:$0xf] %v1279
    %1344 = vst [vmem:[#allocation2 + $0x74] sm:$0xf] %v1280
    %1345 = vst [vmem:[#allocation2 + $0x78] sm:$0xf] %v1281
    %1346 = vst [vmem:[#allocation2 + $0x7c] sm:$0xf] %v1282
    // Predicated region
    $region38: #{tpu_custom_call.1} parent=1 // pred_check
      _
    $region39: #{tpu_custom_call.1} parent=1 // pred_check_branch
      %1348 = sbr.rel (0) target = $region41
    $region40: #{tpu_custom_call.1} parent=1 // pred_region
      %s1350 = ssub.s32 2048, 2048
      %1351 = vsyncadd [#allocation3], %s1350
      %s1352 = sshll.u32 [#allocation2], 4
      %s1353 = int_to_ptr.vmem [resolvable:$true] %s1352
      %1358 = dma.vmem_to_hbm [thread:$0]  %s1353, 2048, %s9, [#allocation3], 64, 64, 4
    $region41: #{tpu_custom_call.1} parent=1 // pred_fallthru
      _
    // Predicated region
    $region42: #{tpu_custom_call.1} parent=1 // pred_check
      _
    $region43: #{tpu_custom_call.1} parent=1 // pred_check_branch
      %1360 = sbr.rel (0) target = $region45
    $region44: #{tpu_custom_call.1} parent=1 // pred_region
      %1361 = dma.done [#allocation3], 2048
    $region45: #{tpu_custom_call.1} parent=1 // pred_fallthru
      _
    %1362 = vsyncpa [#allocation3], 1

</llo_original>
